<compile_context>
chip_gen: v5e
topology: v5e:2x2
jax: 0.10.0
libtpu: 0.0.40
codegen_flags: <defaults>
</compile_context>

<pallas_src>
from typing import NamedTuple

import jax
import jax.numpy as jnp
from jax.experimental import pallas as pl
from jax.experimental.pallas import tpu as pltpu


def _round_up(x, m):
    return ((x + m - 1) // m) * m


def _cdiv(a, b):
    return (a + b - 1) // b


def _leaky_relu(x, slope=0.2):
    return jnp.where(x > 0, x, slope * x)


# ---------------------------------------------------------------------------
# Kernel
# ---------------------------------------------------------------------------
def gaussian_policy_kernel(x_ref, w1_ref, b1_ref, w2_ref, b2_ref,
                           w3_ref, b3_ref, o_ref):
    """One [TB, D_pad] batch tile: tanh(means) of the 3-layer MLP.

    MXU operands are bf16; accumulation, bias add, LeakyReLU and tanh run in
    f32.  w3/b3 were pre-sliced to the 'means' half (and zero-padded to a
    128-lane output) on the host, so no in-kernel slicing is needed.
    """
    x = x_ref[...]                                                   # [TB, D_pad] bf16

    h1 = jnp.dot(x, w1_ref[...], preferred_element_type=jnp.float32)
    h1 = _leaky_relu(h1 + b1_ref[...])                               # [TB, H] f32

    h2 = jnp.dot(h1.astype(jnp.bfloat16), w2_ref[...],
                 preferred_element_type=jnp.float32)
    h2 = _leaky_relu(h2 + b2_ref[...])                               # [TB, H] f32

    out = jnp.dot(h2.astype(jnp.bfloat16), w3_ref[...],
                  preferred_element_type=jnp.float32)
    out = out + b3_ref[...]                                          # [TB, OUT_PAD] f32

    o_ref[...] = jnp.tanh(out).astype(o_ref.dtype)                   # bf16 writeback


# ---------------------------------------------------------------------------
# Host-side parameter preprocessing (done ONCE, reused across calls)
# ---------------------------------------------------------------------------
class PreparedParams(NamedTuple):
    w1: jax.Array      # [D_pad, H]   bf16, zero-padded K rows
    b1: jax.Array      # [1, H]       f32
    w2: jax.Array      # [H, H]       bf16
    b2: jax.Array      # [1, H]       f32
    w3: jax.Array      # [H, OUT_PAD] bf16, means half only, zero-padded lanes
    b3: jax.Array      # [1, OUT_PAD] f32
    d_in: int
    d_pad: int
    hidden: int
    act_dim: int
    out_pad: int


def prepare_params(params):
    """Cast / pad / slice raw f32 params once. params = (w1,b1,w2,b2,w3,b3)."""
    w1, b1, w2, b2, w3, b3 = params
    d_in, hidden = w1.shape
    act_dim = w3.shape[1] // 2

    d_pad = _round_up(d_in, 128)        # K / lane alignment for layer 1
    out_pad = _round_up(act_dim, 128)   # lane-dense (unmasked) output stores

    # forward() only ever uses the means half of the last layer.
    w3m = w3[:, :act_dim]
    b3m = b3[:, :act_dim]

    return PreparedParams(
        w1=jnp.pad(w1.astype(jnp.bfloat16), ((0, d_pad - d_in), (0, 0))),
        b1=b1.astype(jnp.float32),
        w2=w2.astype(jnp.bfloat16),
        b2=b2.astype(jnp.float32),
        w3=jnp.pad(w3m.astype(jnp.bfloat16), ((0, 0), (0, out_pad - act_dim))),
        b3=jnp.pad(b3m.astype(jnp.float32), ((0, 0), (0, out_pad - act_dim))),
        d_in=d_in, d_pad=d_pad, hidden=hidden, act_dim=act_dim, out_pad=out_pad,
    )


# ---------------------------------------------------------------------------
# Batch-tile selection (generation-aware, balanced, >=2 steps for big batches)
# ---------------------------------------------------------------------------
def _default_block_b():
    """Per-generation batch-tile default (bigger HBM BW -> bigger tile)."""
    try:
        kind = jax.devices()[0].device_kind.lower()
    except Exception:  # pragma: no cover
        return 2048
    if "v5 lite" in kind or "v5e" in kind or "v5lite" in kind:
        return 1024
    if "v7" in kind:
        return 4096
    if "v6" in kind:
        return 2048
    return 2048


def _select_batch_tiling(batch, block_b):
    """Balanced tiles: avoids ~2x padding when B is slightly above block_b,
    and splits large single-tile batches in two (v7x megacore)."""
    b8 = _round_up(max(batch, 1), 8)
    n_tiles = _cdiv(b8, block_b)
    if n_tiles == 1 and b8 >= 512:
        n_tiles = 2   # let dimension_semantics=("parallel",) use both v7x cores
    tb = _round_up(_cdiv(b8, n_tiles), 8)
    b_pad = tb * n_tiles
    return tb, b_pad


# ---------------------------------------------------------------------------
# pallas_call construction + forward
# ---------------------------------------------------------------------------
def _build_call(tb, n_tiles, p: PreparedParams, single_buffer_weights):
    d_pad, hid, out_pad = p.d_pad, p.hidden, p.out_pad
    resident = lambda i: (0, 0)          # weights/biases: same block every step

    w_kwargs = {}
    if single_buffer_weights and hasattr(pl, "Buffered"):
        # Constant index_map already skips re-DMA; Buffered(1) also drops the
        # second (unused) VMEM copy of each weight.
        w_kwargs = {"pipeline_mode": pl.Buffered(1)}

    in_specs = [
        pl.BlockSpec((tb, d_pad), lambda i: (i, 0)),               # x tile
        pl.BlockSpec((d_pad, hid), resident, **w_kwargs),          # w1
        pl.BlockSpec((1, hid), resident, **w_kwargs),              # b1
        pl.BlockSpec((hid, hid), resident, **w_kwargs),            # w2
        pl.BlockSpec((1, hid), resident, **w_kwargs),              # b2
        pl.BlockSpec((hid, out_pad), resident, **w_kwargs),        # w3 (means half)
        pl.BlockSpec((1, out_pad), resident, **w_kwargs),          # b3 (means half)
    ]

    return pl.pallas_call(
        gaussian_policy_kernel,
        out_shape=jax.ShapeDtypeStruct((tb * n_tiles, out_pad), jnp.bfloat16),
        grid=(n_tiles,),
        in_specs=in_specs,
        out_specs=pl.BlockSpec((tb, out_pad), lambda i: (i, 0)),
        compiler_params=pltpu.CompilerParams(
            dimension_semantics=("parallel",)),
    )


def gaussian_policy_forward(feature_action, prepared: PreparedParams, *,
                            block_b=None):
    """Returns tanh(means) with shape [B, action_dim] (f32)."""
    if block_b is None:
        block_b = _default_block_b()

    batch, d_in = feature_action.shape
    assert d_in == prepared.d_in, "feature_action dim mismatch with params"

    tb, b_pad = _select_batch_tiling(batch, block_b)
    n_tiles = b_pad // tb

    x = jnp.pad(feature_action.astype(jnp.bfloat16),
                ((0, b_pad - batch), (0, prepared.d_pad - d_in)))

    args = (x, prepared.w1, prepared.b1, prepared.w2, prepared.b2,
            prepared.w3, prepared.b3)
    try:
        out = _build_call(tb, n_tiles, prepared, True)(*args)
    except Exception:
        # Fallback: default (double-buffered) specs for the resident weights.
        out = _build_call(tb, n_tiles, prepared, False)(*args)

    # Padded lanes / rows are exactly zero (tanh(0)) and sliced away here.
    return out[:batch, :prepared.act_dim].astype(jnp.float32)


# ---------------------------------------------------------------------------
# Reference + demo
# ---------------------------------------------------------------------------
def init_params(key, input_dim, hidden_units, output_dim):
    """Deterministic synthetic initialization (stands in for initialize_weight)."""
    dims = (input_dim,) + tuple(hidden_units) + (output_dim,)
    params = []
    for i in range(len(dims) - 1):
        key, kw, kb = jax.random.split(key, 3)
        fan_in = dims[i]
        w = jax.random.normal(kw, (dims[i], dims[i + 1]), jnp.float32) / jnp.sqrt(fan_in)
        b = 0.01 * jax.random.normal(kb, (1, dims[i + 1]), jnp.float32)
        params.extend([w, b])
    return tuple(params)


def reference_forward(feature_action, params):
    """Pure-JAX f32 reference for correctness checking."""
    w1, b1, w2, b2, w3, b3 = params
    h = _leaky_relu(feature_action @ w1 + b1)
    h = _leaky_relu(h @ w2 + b2)
    out = h @ w3 + b3
    act_dim = w3.shape[1] // 2
    return jnp.tanh(out[:, :act_dim])


if __name__ == "__main__":
    # Small shapes consistent with the module's __init__:
    action_dim = 2
    num_sequences = 8
    feature_dim = 32
    hidden_units = (256, 256)
    batch = 2

    input_dim = num_sequences * feature_dim + (num_sequences - 1) * action_dim  # 270
    output_dim = 2 * action_dim

    key = jax.random.PRNGKey(0)
    key, kx = jax.random.split(key)
    feature_action = jax.random.normal(kx, (batch, input_dim), jnp.float32)

    params = init_params(key, input_dim, hidden_units, output_dim)
    prepared = prepare_params(params)   # hoisted: cast/pad/slice done once

    out = gaussian_policy_forward(feature_action, prepared)
    out = jax.block_until_ready(out)

    ref = reference_forward(feature_action, params)
    assert out.shape == (batch, action_dim)
    # bf16 MXU operands + bf16 writeback => relax tolerance vs f32 reference.
    assert jnp.allclose(out, ref, atol=3e-2, rtol=3e-2), "mismatch vs reference"

    # TODO(synk): GaussianPolicy.sample() (reparameterized sampling + log_pi)
    # is not part of forward() and is not implemented here.

    print("KERNEL_OK")
</pallas_src>

<mosaic_0001>
module attributes {stable_mosaic.version = 11 : i64} {
  func.func @gaussian_policy_kernel(%arg0: i32, %arg1: memref<8x384xbf16, #tpu.memory_space<vmem>>, %arg2: memref<384x256xbf16, #tpu.memory_space<vmem>>, %arg3: memref<1x256xf32, #tpu.memory_space<vmem>>, %arg4: memref<256x256xbf16, #tpu.memory_space<vmem>>, %arg5: memref<1x256xf32, #tpu.memory_space<vmem>>, %arg6: memref<256x128xbf16, #tpu.memory_space<vmem>>, %arg7: memref<1x128xf32, #tpu.memory_space<vmem>>, %arg8: memref<8x128xbf16, #tpu.memory_space<vmem>>) attributes {dimension_semantics = [#tpu.dimension_semantics<parallel>], iteration_bounds = array<i64: 1>, scalar_prefetch = 0 : i64, scratch_operands = 0 : i64, tpu.core_type = #tpu.core_type<tc>, window_params = [{transform_indices = @transform_0, window_bounds = array<i64: 8, 384>}, {pipeline_mode = #tpu.pipeline_mode<synchronous>, transform_indices = @transform_1, window_bounds = array<i64: 384, 256>}, {pipeline_mode = #tpu.pipeline_mode<synchronous>, transform_indices = @transform_2, window_bounds = array<i64: 1, 256>}, {pipeline_mode = #tpu.pipeline_mode<synchronous>, transform_indices = @transform_3, window_bounds = array<i64: 256, 256>}, {pipeline_mode = #tpu.pipeline_mode<synchronous>, transform_indices = @transform_4, window_bounds = array<i64: 1, 256>}, {pipeline_mode = #tpu.pipeline_mode<synchronous>, transform_indices = @transform_5, window_bounds = array<i64: 256, 128>}, {pipeline_mode = #tpu.pipeline_mode<synchronous>, transform_indices = @transform_6, window_bounds = array<i64: 1, 128>}, {transform_indices = @transform_7, window_bounds = array<i64: 8, 128>}]} {
    %c0 = arith.constant 0 : index
    %c0_0 = arith.constant 0 : index
    %0 = vector.load %arg1[%c0, %c0_0] : memref<8x384xbf16, #tpu.memory_space<vmem>>, vector<8x384xbf16>
    %c0_1 = arith.constant 0 : index
    %c0_2 = arith.constant 0 : index
    %1 = vector.load %arg2[%c0_1, %c0_2] : memref<384x256xbf16, #tpu.memory_space<vmem>>, vector<384x256xbf16>
    %cst = arith.constant dense<0.000000e+00> : vector<8x256xf32>
    %2 = tpu.matmul %0, %1, %cst {dimension_numbers = #tpu.dot_dimension_numbers<[1], [0], [0], [1], [0, 0, 1, 1], [], []>} : vector<8x384xbf16>, vector<384x256xbf16>, vector<8x256xf32> -> vector<8x256xf32>
    %c0_3 = arith.constant 0 : index
    %c0_4 = arith.constant 0 : index
    %3 = vector.load %arg3[%c0_3, %c0_4] : memref<1x256xf32, #tpu.memory_space<vmem>>, vector<1x256xf32>
    %4 = vector.broadcast %3 : vector<1x256xf32> to vector<8x256xf32>
    %5 = arith.addf %2, %4 : vector<8x256xf32>
    %cst_5 = arith.constant 0.000000e+00 : f32
    %6 = vector.broadcast %cst_5 : f32 to vector<8x256xf32>
    %7 = arith.cmpf ogt, %5, %6 : vector<8x256xf32>
    %cst_6 = arith.constant 2.000000e-01 : f32
    %8 = vector.broadcast %cst_6 : f32 to vector<8x256xf32>
    %9 = arith.mulf %8, %5 : vector<8x256xf32>
    %10 = arith.select %7, %5, %9 : vector<8x256xi1>, vector<8x256xf32>
    %11 = arith.truncf %10 : vector<8x256xf32> to vector<8x256xbf16>
    %c0_7 = arith.constant 0 : index
    %c0_8 = arith.constant 0 : index
    %12 = vector.load %arg4[%c0_7, %c0_8] : memref<256x256xbf16, #tpu.memory_space<vmem>>, vector<256x256xbf16>
    %cst_9 = arith.constant dense<0.000000e+00> : vector<8x256xf32>
    %13 = tpu.matmul %11, %12, %cst_9 {dimension_numbers = #tpu.dot_dimension_numbers<[1], [0], [0], [1], [0, 0, 1, 1], [], []>} : vector<8x256xbf16>, vector<256x256xbf16>, vector<8x256xf32> -> vector<8x256xf32>
    %c0_10 = arith.constant 0 : index
    %c0_11 = arith.constant 0 : index
    %14 = vector.load %arg5[%c0_10, %c0_11] : memref<1x256xf32, #tpu.memory_space<vmem>>, vector<1x256xf32>
    %15 = vector.broadcast %14 : vector<1x256xf32> to vector<8x256xf32>
    %16 = arith.addf %13, %15 : vector<8x256xf32>
    %cst_12 = arith.constant 0.000000e+00 : f32
    %17 = vector.broadcast %cst_12 : f32 to vector<8x256xf32>
    %18 = arith.cmpf ogt, %16, %17 : vector<8x256xf32>
    %cst_13 = arith.constant 2.000000e-01 : f32
    %19 = vector.broadcast %cst_13 : f32 to vector<8x256xf32>
    %20 = arith.mulf %19, %16 : vector<8x256xf32>
    %21 = arith.select %18, %16, %20 : vector<8x256xi1>, vector<8x256xf32>
    %22 = arith.truncf %21 : vector<8x256xf32> to vector<8x256xbf16>
    %c0_14 = arith.constant 0 : index
    %c0_15 = arith.constant 0 : index
    %23 = vector.load %arg6[%c0_14, %c0_15] : memref<256x128xbf16, #tpu.memory_space<vmem>>, vector<256x128xbf16>
    %cst_16 = arith.constant dense<0.000000e+00> : vector<8x128xf32>
    %24 = tpu.matmul %22, %23, %cst_16 {dimension_numbers = #tpu.dot_dimension_numbers<[1], [0], [0], [1], [0, 0, 1, 1], [], []>} : vector<8x256xbf16>, vector<256x128xbf16>, vector<8x128xf32> -> vector<8x128xf32>
    %c0_17 = arith.constant 0 : index
    %c0_18 = arith.constant 0 : index
    %25 = vector.load %arg7[%c0_17, %c0_18] : memref<1x128xf32, #tpu.memory_space<vmem>>, vector<1x128xf32>
    %26 = vector.broadcast %25 : vector<1x128xf32> to vector<8x128xf32>
    %27 = arith.addf %24, %26 : vector<8x128xf32>
    %28 = math.tanh %27 : vector<8x128xf32>
    %29 = arith.truncf %28 : vector<8x128xf32> to vector<8x128xbf16>
    %c0_19 = arith.constant 0 : index
    %c0_20 = arith.constant 0 : index
    %30 = vector.load %arg8[%c0_19, %c0_20] : memref<8x128xbf16, #tpu.memory_space<vmem>>, vector<8x128xbf16>
    tpu.vector_store %arg8[%c0_19, %c0_20], %29 {strides = array<i32>} : memref<8x128xbf16, #tpu.memory_space<vmem>>, vector<8x128xbf16>,
    return
  }
  func.func @transform_0(%arg0: i32) -> (i32, i32) {
    %c0_i32 = arith.constant 0 : i32
    %c0_i32_0 = arith.constant 0 : i32
    return %arg0, %c0_i32 : i32, i32
  }
  func.func @transform_1(%arg0: i32) -> (i32, i32) {
    %c0_i32 = arith.constant 0 : i32
    %c0_i32_0 = arith.constant 0 : i32
    %c0_i32_1 = arith.constant 0 : i32
    return %c0_i32, %c0_i32_0 : i32, i32
  }
  func.func @transform_2(%arg0: i32) -> (i32, i32) {
    %c0_i32 = arith.constant 0 : i32
    %c0_i32_0 = arith.constant 0 : i32
    %c0_i32_1 = arith.constant 0 : i32
    return %c0_i32, %c0_i32_0 : i32, i32
  }
  func.func @transform_3(%arg0: i32) -> (i32, i32) {
    %c0_i32 = arith.constant 0 : i32
    %c0_i32_0 = arith.constant 0 : i32
    %c0_i32_1 = arith.constant 0 : i32
    return %c0_i32, %c0_i32_0 : i32, i32
  }
  func.func @transform_4(%arg0: i32) -> (i32, i32) {
    %c0_i32 = arith.constant 0 : i32
    %c0_i32_0 = arith.constant 0 : i32
    %c0_i32_1 = arith.constant 0 : i32
    return %c0_i32, %c0_i32_0 : i32, i32
  }
  func.func @transform_5(%arg0: i32) -> (i32, i32) {
    %c0_i32 = arith.constant 0 : i32
    %c0_i32_0 = arith.constant 0 : i32
    %c0_i32_1 = arith.constant 0 : i32
    return %c0_i32, %c0_i32_0 : i32, i32
  }
  func.func @transform_6(%arg0: i32) -> (i32, i32) {
    %c0_i32 = arith.constant 0 : i32
    %c0_i32_0 = arith.constant 0 : i32
    %c0_i32_1 = arith.constant 0 : i32
    return %c0_i32, %c0_i32_0 : i32, i32
  }
  func.func @transform_7(%arg0: i32) -> (i32, i32) {
    %c0_i32 = arith.constant 0 : i32
    %c0_i32_0 = arith.constant 0 : i32
    return %arg0, %c0_i32 : i32, i32
  }
}

module attributes {stable_mosaic.version = 11 : i64} {
  func.func @gaussian_policy_kernel(%arg0: i32, %arg1: memref<8x384xbf16, #tpu.memory_space<vmem>>, %arg2: memref<384x256xbf16, #tpu.memory_space<vmem>>, %arg3: memref<1x256xf32, #tpu.memory_space<vmem>>, %arg4: memref<256x256xbf16, #tpu.memory_space<vmem>>, %arg5: memref<1x256xf32, #tpu.memory_space<vmem>>, %arg6: memref<256x128xbf16, #tpu.memory_space<vmem>>, %arg7: memref<1x128xf32, #tpu.memory_space<vmem>>, %arg8: memref<8x128xbf16, #tpu.memory_space<vmem>>) attributes {dimension_semantics = [#tpu.dimension_semantics<parallel>], iteration_bounds = array<i64: 1>, scalar_prefetch = 0 : i64, scratch_operands = 0 : i64, tpu.core_type = #tpu.core_type<tc>, window_params = [{transform_indices = @transform_0, window_bounds = array<i64: 8, 384>}, {pipeline_mode = #tpu.pipeline_mode<synchronous>, transform_indices = @transform_1, window_bounds = array<i64: 384, 256>}, {pipeline_mode = #tpu.pipeline_mode<synchronous>, transform_indices = @transform_2, window_bounds = array<i64: 1, 256>}, {pipeline_mode = #tpu.pipeline_mode<synchronous>, transform_indices = @transform_3, window_bounds = array<i64: 256, 256>}, {pipeline_mode = #tpu.pipeline_mode<synchronous>, transform_indices = @transform_4, window_bounds = array<i64: 1, 256>}, {pipeline_mode = #tpu.pipeline_mode<synchronous>, transform_indices = @transform_5, window_bounds = array<i64: 256, 128>}, {pipeline_mode = #tpu.pipeline_mode<synchronous>, transform_indices = @transform_6, window_bounds = array<i64: 1, 128>}, {transform_indices = @transform_7, window_bounds = array<i64: 8, 128>}]} {
    %c0 = arith.constant 0 : index
    %c0_0 = arith.constant 0 : index
    %0 = vector.load %arg1[%c0, %c0_0] : memref<8x384xbf16, #tpu.memory_space<vmem>>, vector<8x384xbf16>
    %c0_1 = arith.constant 0 : index
    %c0_2 = arith.constant 0 : index
    %1 = vector.load %arg2[%c0_1, %c0_2] : memref<384x256xbf16, #tpu.memory_space<vmem>>, vector<384x256xbf16>
    %cst = arith.constant dense<0.000000e+00> : vector<8x256xf32>
    %2 = tpu.matmul %0, %1, %cst {dimension_numbers = #tpu.dot_dimension_numbers<[1], [0], [0], [1], [0, 0, 1, 1], [], []>} : vector<8x384xbf16>, vector<384x256xbf16>, vector<8x256xf32> -> vector<8x256xf32>
    %c0_3 = arith.constant 0 : index
    %c0_4 = arith.constant 0 : index
    %3 = vector.load %arg3[%c0_3, %c0_4] : memref<1x256xf32, #tpu.memory_space<vmem>>, vector<1x256xf32>
    %4 = vector.broadcast %3 : vector<1x256xf32> to vector<8x256xf32>
    %5 = arith.addf %2, %4 : vector<8x256xf32>
    %cst_5 = arith.constant 0.000000e+00 : f32
    %6 = vector.broadcast %cst_5 : f32 to vector<8x256xf32>
    %7 = arith.cmpf ogt, %5, %6 : vector<8x256xf32>
    %cst_6 = arith.constant 2.000000e-01 : f32
    %8 = vector.broadcast %cst_6 : f32 to vector<8x256xf32>
    %9 = arith.mulf %8, %5 : vector<8x256xf32>
    %10 = arith.select %7, %5, %9 : vector<8x256xi1>, vector<8x256xf32>
    %11 = arith.truncf %10 : vector<8x256xf32> to vector<8x256xbf16>
    %c0_7 = arith.constant 0 : index
    %c0_8 = arith.constant 0 : index
    %12 = vector.load %arg4[%c0_7, %c0_8] : memref<256x256xbf16, #tpu.memory_space<vmem>>, vector<256x256xbf16>
    %cst_9 = arith.constant dense<0.000000e+00> : vector<8x256xf32>
    %13 = tpu.matmul %11, %12, %cst_9 {dimension_numbers = #tpu.dot_dimension_numbers<[1], [0], [0], [1], [0, 0, 1, 1], [], []>} : vector<8x256xbf16>, vector<256x256xbf16>, vector<8x256xf32> -> vector<8x256xf32>
    %c0_10 = arith.constant 0 : index
    %c0_11 = arith.constant 0 : index
    %14 = vector.load %arg5[%c0_10, %c0_11] : memref<1x256xf32, #tpu.memory_space<vmem>>, vector<1x256xf32>
    %15 = vector.broadcast %14 : vector<1x256xf32> to vector<8x256xf32>
    %16 = arith.addf %13, %15 : vector<8x256xf32>
    %cst_12 = arith.constant 0.000000e+00 : f32
    %17 = vector.broadcast %cst_12 : f32 to vector<8x256xf32>
    %18 = arith.cmpf ogt, %16, %17 : vector<8x256xf32>
    %cst_13 = arith.constant 2.000000e-01 : f32
    %19 = vector.broadcast %cst_13 : f32 to vector<8x256xf32>
    %20 = arith.mulf %19, %16 : vector<8x256xf32>
    %21 = arith.select %18, %16, %20 : vector<8x256xi1>, vector<8x256xf32>
    %22 = arith.truncf %21 : vector<8x256xf32> to vector<8x256xbf16>
    %c0_14 = arith.constant 0 : index
    %c0_15 = arith.constant 0 : index
    %23 = vector.load %arg6[%c0_14, %c0_15] : memref<256x128xbf16, #tpu.memory_space<vmem>>, vector<256x128xbf16>
    %cst_16 = arith.constant dense<0.000000e+00> : vector<8x128xf32>
    %24 = tpu.matmul %22, %23, %cst_16 {dimension_numbers = #tpu.dot_dimension_numbers<[1], [0], [0], [1], [0, 0, 1, 1], [], []>} : vector<8x256xbf16>, vector<256x128xbf16>, vector<8x128xf32> -> vector<8x128xf32>
    %c0_17 = arith.constant 0 : index
    %c0_18 = arith.constant 0 : index
    %25 = vector.load %arg7[%c0_17, %c0_18] : memref<1x128xf32, #tpu.memory_space<vmem>>, vector<1x128xf32>
    %26 = vector.broadcast %25 : vector<1x128xf32> to vector<8x128xf32>
    %27 = arith.addf %24, %26 : vector<8x128xf32>
    %28 = math.tanh %27 : vector<8x128xf32>
    %29 = arith.truncf %28 : vector<8x128xf32> to vector<8x128xbf16>
    %c0_19 = arith.constant 0 : index
    %c0_20 = arith.constant 0 : index
    %30 = vector.load %arg8[%c0_19, %c0_20] : memref<8x128xbf16, #tpu.memory_space<vmem>>, vector<8x128xbf16>
    tpu.vector_store %arg8[%c0_19, %c0_20], %29 {strides = array<i32>} : memref<8x128xbf16, #tpu.memory_space<vmem>>, vector<8x128xbf16>,
    return
  }
  func.func @transform_0(%arg0: i32) -> (i32, i32) {
    %c0_i32 = arith.constant 0 : i32
    %c0_i32_0 = arith.constant 0 : i32
    return %arg0, %c0_i32 : i32, i32
  }
  func.func @transform_1(%arg0: i32) -> (i32, i32) {
    %c0_i32 = arith.constant 0 : i32
    %c0_i32_0 = arith.constant 0 : i32
    %c0_i32_1 = arith.constant 0 : i32
    return %c0_i32, %c0_i32_0 : i32, i32
  }
  func.func @transform_2(%arg0: i32) -> (i32, i32) {
    %c0_i32 = arith.constant 0 : i32
    %c0_i32_0 = arith.constant 0 : i32
    %c0_i32_1 = arith.constant 0 : i32
    return %c0_i32, %c0_i32_0 : i32, i32
  }
  func.func @transform_3(%arg0: i32) -> (i32, i32) {
    %c0_i32 = arith.constant 0 : i32
    %c0_i32_0 = arith.constant 0 : i32
    %c0_i32_1 = arith.constant 0 : i32
    return %c0_i32, %c0_i32_0 : i32, i32
  }
  func.func @transform_4(%arg0: i32) -> (i32, i32) {
    %c0_i32 = arith.constant 0 : i32
    %c0_i32_0 = arith.constant 0 : i32
    %c0_i32_1 = arith.constant 0 : i32
    return %c0_i32, %c0_i32_0 : i32, i32
  }
  func.func @transform_5(%arg0: i32) -> (i32, i32) {
    %c0_i32 = arith.constant 0 : i32
    %c0_i32_0 = arith.constant 0 : i32
    %c0_i32_1 = arith.constant 0 : i32
    return %c0_i32, %c0_i32_0 : i32, i32
  }
  func.func @transform_6(%arg0: i32) -> (i32, i32) {
    %c0_i32 = arith.constant 0 : i32
    %c0_i32_0 = arith.constant 0 : i32
    %c0_i32_1 = arith.constant 0 : i32
    return %c0_i32, %c0_i32_0 : i32, i32
  }
  func.func @transform_7(%arg0: i32) -> (i32, i32) {
    %c0_i32 = arith.constant 0 : i32
    %c0_i32_0 = arith.constant 0 : i32
    return %arg0, %c0_i32 : i32, i32
  }
}

</mosaic_0001>

<llo_original>
// kernel: tpu_custom_call.1
$region0: #{tpu_custom_call.1}
  #allocation0 [shape = 'u32[]', space=smem, size = 0x4, offset = 0x4, fixed_abs, tag = 'smem constant byte address 0x4 - core index']
  #allocation1 [shape = 'u32[72,128]{1,0:T(1,128)}', space=vmem, size = 0x9000, scoped, tag = 'internal scratch']
  %s0 = inlined_call_operand.hbm [shape: bf16[8,384], index: 0, kind: input, shape index: {}]
  %s1 = inlined_call_operand.hbm [shape: bf16[384,256], index: 1, kind: input, shape index: {}]
  %s2 = inlined_call_operand.hbm [shape: f32[1,256], index: 2, kind: input, shape index: {}]
  %s3 = inlined_call_operand.hbm [shape: bf16[256,256], index: 3, kind: input, shape index: {}]
  %s4 = inlined_call_operand.vmem [shape: f32[1,256], index: 4, kind: input, shape index: {}]
  %s5 = inlined_call_operand.hbm [shape: bf16[256,128], index: 5, kind: input, shape index: {}]
  %s6 = inlined_call_operand.vmem [shape: f32[1,128], index: 6, kind: input, shape index: {}]
  %s7 = inlined_call_operand.hbm [shape: bf16[8,128], index: 7, kind: output, shape index: {}]
  %s8 = sld [smem:[#allocation0]]
  $region58: #{tpu_custom_call.1} parent=0
    _
  %s10 = ssub.s32 1, %s8
  %s11 = scalar_select 0, %s10, %s8
  $region1: #{tpu_custom_call.1} parent=0
    #allocation2 [shape = 'u8[6144]{0}', space=vmem, size = 0x1800, scoped, tag = 'input window, operand 0, single buffered']
    #allocation3 [shape = 's32[1]{0}', space=sflag, size = 0x4, scoped, tag = 'scoped memory for tpu_custom_call.1']
    #allocation4 [shape = 's32[1]{0}', space=sflag, size = 0x4, scoped, tag = 'scoped memory for tpu_custom_call.1']
    #allocation5 [shape = 'u8[196608]{0}', space=vmem, size = 0x30000, scoped, tag = 'input window, operand 1, single buffered']
    #allocation6 [shape = 's32[1]{0}', space=sflag, size = 0x4, scoped, tag = 'scoped memory for tpu_custom_call.1']
    #allocation7 [shape = 'u8[1024]{0}', space=vmem, size = 0x400, scoped, tag = 'input window, operand 2, single buffered']
    #allocation8 [shape = 'u8[131072]{0}', space=vmem, size = 0x20000, scoped, tag = 'input window, operand 3, single buffered']
    #allocation9 [shape = 's32[1]{0}', space=sflag, size = 0x4, scoped, tag = 'scoped memory for tpu_custom_call.1']
    #allocation10 [shape = 'u8[65536]{0}', space=vmem, size = 0x10000, scoped, tag = 'input window, operand 5, single buffered']
    #allocation11 [shape = 'u8[2048]{0}', space=vmem, size = 0x800, scoped, tag = 'output window, operand 0, single buffered']
    %12 = vsyncpa [#allocation3], 0
    %13 = vsyncpa [#allocation6], 0
    %14 = vsyncpa [#allocation9], 0
    %15 = vsyncpa [#allocation4], 0
    // Predicated region
    $region2: #{tpu_custom_call.1} parent=1 // pred_check
      _
    $region3: #{tpu_custom_call.1} parent=1 // pred_check_branch
      %17 = sbr.rel (0) target = $region5
    $region4: #{tpu_custom_call.1} parent=1 // pred_region
      %19 = vsyncadd [#allocation3], 0
      %s21 = sshll.u32 %s0, 4
      %s22 = int_to_ptr.hbm [resolvable:$true] %s21
      %s23 = sshll.u32 [#allocation2], 4
      %s24 = int_to_ptr.vmem [resolvable:$true] %s23
      %26 = dma.hbm_to_vmem [thread:$0]  %s22, 192, %s24, [#allocation3]
    $region5: #{tpu_custom_call.1} parent=1 // pred_fallthru
      _
    // Predicated region
    $region6: #{tpu_custom_call.1} parent=1 // pred_check
      _
    $region7: #{tpu_custom_call.1} parent=1 // pred_check_branch
      %28 = sbr.rel (0) target = $region9
    $region8: #{tpu_custom_call.1} parent=1 // pred_region
      %30 = vsyncadd [#allocation6], 0
      %s31 = sshll.u32 %s1, 4
      %s32 = int_to_ptr.hbm [resolvable:$true] %s31
      %s33 = sshll.u32 [#allocation5], 4
      %s34 = int_to_ptr.vmem [resolvable:$true] %s33
      %39 = dma.hbm_to_vmem [thread:$0]  %s32, 6144, %s34, [#allocation6], 128, 128, 8
    $region9: #{tpu_custom_call.1} parent=1 // pred_fallthru
      _
    // Predicated region
    $region10: #{tpu_custom_call.1} parent=1 // pred_check
      _
    $region11: #{tpu_custom_call.1} parent=1 // pred_check_branch
      %41 = sbr.rel (0) target = $region13
    $region12: #{tpu_custom_call.1} parent=1 // pred_region
      %43 = vsyncadd [#allocation6], 0
      %s45 = sshll.u32 %s2, 4
      %s46 = int_to_ptr.hbm [resolvable:$true] %s45
      %s47 = sshll.u32 [#allocation7], 4
      %s48 = int_to_ptr.vmem [resolvable:$true] %s47
      %50 = dma.hbm_to_vmem [thread:$0]  %s46, 32, %s48, [#allocation6]
    $region13: #{tpu_custom_call.1} parent=1 // pred_fallthru
      _
    // Predicated region
    $region14: #{tpu_custom_call.1} parent=1 // pred_check
      _
    $region15: #{tpu_custom_call.1} parent=1 // pred_check_branch
      %52 = sbr.rel (0) target = $region17
    $region16: #{tpu_custom_call.1} parent=1 // pred_region
      %54 = vsyncadd [#allocation9], 0
      %s55 = sshll.u32 %s3, 4
      %s56 = int_to_ptr.hbm [resolvable:$true] %s55
      %s57 = sshll.u32 [#allocation8], 4
      %s58 = int_to_ptr.vmem [resolvable:$true] %s57
      %63 = dma.hbm_to_vmem [thread:$0]  %s56, 4096, %s58, [#allocation9], 128, 128, 8
    $region17: #{tpu_custom_call.1} parent=1 // pred_fallthru
      _
    // Predicated region
    $region18: #{tpu_custom_call.1} parent=1 // pred_check
      _
    $region19: #{tpu_custom_call.1} parent=1 // pred_check_branch
      %65 = sbr.rel (0) target = $region21
    $region20: #{tpu_custom_call.1} parent=1 // pred_region
      _
    $region21: #{tpu_custom_call.1} parent=1 // pred_fallthru
      _
    // Predicated region
    $region22: #{tpu_custom_call.1} parent=1 // pred_check
      _
    $region23: #{tpu_custom_call.1} parent=1 // pred_check_branch
      %67 = sbr.rel (0) target = $region25
    $region24: #{tpu_custom_call.1} parent=1 // pred_region
      %69 = vsyncadd [#allocation9], 0
      %s70 = sshll.u32 %s5, 4
      %s71 = int_to_ptr.hbm [resolvable:$true] %s70
      %s72 = sshll.u32 [#allocation10], 4
      %s73 = int_to_ptr.vmem [resolvable:$true] %s72
      %78 = dma.hbm_to_vmem [thread:$0]  %s71, 2048, %s73, [#allocation9], 64, 64, 4
    $region25: #{tpu_custom_call.1} parent=1 // pred_fallthru
      _
    // Predicated region
    $region26: #{tpu_custom_call.1} parent=1 // pred_check
      _
    $region27: #{tpu_custom_call.1} parent=1 // pred_check_branch
      %80 = sbr.rel (0) target = $region29
    $region28: #{tpu_custom_call.1} parent=1 // pred_region
      _
    $region29: #{tpu_custom_call.1} parent=1 // pred_fallthru
      _
    // Predicated region
    $region30: #{tpu_custom_call.1} parent=1 // pred_check
      _
    $region31: #{tpu_custom_call.1} parent=1 // pred_check_branch
      %82 = sbr.rel (0) target = $region33
    $region32: #{tpu_custom_call.1} parent=1 // pred_region
      %84 = dma.done [#allocation3], 192
    $region33: #{tpu_custom_call.1} parent=1 // pred_fallthru
      _
    // Predicated region
    $region34: #{tpu_custom_call.1} parent=1 // pred_check
      _
    $region35: #{tpu_custom_call.1} parent=1 // pred_check_branch
      %86 = sbr.rel (0) target = $region37
    $region36: #{tpu_custom_call.1} parent=1 // pred_region
      %88 = dma.done [#allocation6], 6144
    $region37: #{tpu_custom_call.1} parent=1 // pred_fallthru
      _
    // Predicated region
    $region38: #{tpu_custom_call.1} parent=1 // pred_check
      _
    $region39: #{tpu_custom_call.1} parent=1 // pred_check_branch
      %90 = sbr.rel (0) target = $region41
    $region40: #{tpu_custom_call.1} parent=1 // pred_region
      %92 = dma.done [#allocation6], 32
    $region41: #{tpu_custom_call.1} parent=1 // pred_fallthru
      _
    // Predicated region
    $region42: #{tpu_custom_call.1} parent=1 // pred_check
      _
    $region43: #{tpu_custom_call.1} parent=1 // pred_check_branch
      %94 = sbr.rel (0) target = $region45
    $region44: #{tpu_custom_call.1} parent=1 // pred_region
      %96 = dma.done [#allocation9], 4096
    $region45: #{tpu_custom_call.1} parent=1 // pred_fallthru
      _
    // Predicated region
    $region46: #{tpu_custom_call.1} parent=1 // pred_check
      _
    $region47: #{tpu_custom_call.1} parent=1 // pred_check_branch
      %98 = sbr.rel (0) target = $region49
    $region48: #{tpu_custom_call.1} parent=1 // pred_region
      %100 = dma.done [#allocation9], 2048
    $region49: #{tpu_custom_call.1} parent=1 // pred_fallthru
      _
    %v101 = vld [vmem:[#allocation2] sm:$0xff]
    %v102 = vld [vmem:[#allocation2 + $0x8] sm:$0xf]
    %v103 = vld [vmem:[#allocation5] sm:$0xff]
    %v104 = vld [vmem:[#allocation5 + $0x8] sm:$0xff]
    %v105 = vld [vmem:[#allocation5 + $0x10] sm:$0xff]
    %v106 = vld [vmem:[#allocation5 + $0x18] sm:$0xff]
    %v107 = vld [vmem:[#allocation5 + $0x20] sm:$0xff]
    %v108 = vld [vmem:[#allocation5 + $0x28] sm:$0xff]
    %v109 = vld [vmem:[#allocation5 + $0x30] sm:$0xff]
    %v110 = vld [vmem:[#allocation5 + $0x38] sm:$0xff]
    %v111 = vld [vmem:[#allocation5 + $0x40] sm:$0xff]
    %v112 = vld [vmem:[#allocation5 + $0x48] sm:$0xff]
    %v113 = vld [vmem:[#allocation5 + $0x50] sm:$0xff]
    %v114 = vld [vmem:[#allocation5 + $0x58] sm:$0xff]
    %v115 = vld [vmem:[#allocation5 + $0x60] sm:$0xff]
    %v116 = vld [vmem:[#allocation5 + $0x68] sm:$0xff]
    %v117 = vld [vmem:[#allocation5 + $0x70] sm:$0xff]
    %v118 = vld [vmem:[#allocation5 + $0x78] sm:$0xff]
    %v119 = vld [vmem:[#allocation5 + $0x80] sm:$0xff]
    %v120 = vld [vmem:[#allocation5 + $0x88] sm:$0xff]
    %v121 = vld [vmem:[#allocation5 + $0x90] sm:$0xff]
    %v122 = vld [vmem:[#allocation5 + $0x98] sm:$0xff]
    %v123 = vld [vmem:[#allocation5 + $0xa0] sm:$0xff]
    %v124 = vld [vmem:[#allocation5 + $0xa8] sm:$0xff]
    %v125 = vld [vmem:[#allocation5 + $0xb0] sm:$0xff]
    %v126 = vld [vmem:[#allocation5 + $0xb8] sm:$0xff]
    %v127 = vld [vmem:[#allocation5 + $0xc0] sm:$0xff]
    %v128 = vld [vmem:[#allocation5 + $0xc8] sm:$0xff]
    %v129 = vld [vmem:[#allocation5 + $0xd0] sm:$0xff]
    %v130 = vld [vmem:[#allocation5 + $0xd8] sm:$0xff]
    %v131 = vld [vmem:[#allocation5 + $0xe0] sm:$0xff]
    %v132 = vld [vmem:[#allocation5 + $0xe8] sm:$0xff]
    %v133 = vld [vmem:[#allocation5 + $0xf0] sm:$0xff]
    %v134 = vld [vmem:[#allocation5 + $0xf8] sm:$0xff]
    %v135 = vld [vmem:[#allocation5 + $0x100] sm:$0xff]
    %v136 = vld [vmem:[#allocation5 + $0x108] sm:$0xff]
    %v137 = vld [vmem:[#allocation5 + $0x110] sm:$0xff]
    %v138 = vld [vmem:[#allocation5 + $0x118] sm:$0xff]
    %v139 = vld [vmem:[#allocation5 + $0x120] sm:$0xff]
    %v140 = vld [vmem:[#allocation5 + $0x128] sm:$0xff]
    %v141 = vld [vmem:[#allocation5 + $0x130] sm:$0xff]
    %v142 = vld [vmem:[#allocation5 + $0x138] sm:$0xff]
    %v143 = vld [vmem:[#allocation5 + $0x140] sm:$0xff]
    %v144 = vld [vmem:[#allocation5 + $0x148] sm:$0xff]
    %v145 = vld [vmem:[#allocation5 + $0x150] sm:$0xff]
    %v146 = vld [vmem:[#allocation5 + $0x158] sm:$0xff]
    %v147 = vld [vmem:[#allocation5 + $0x160] sm:$0xff]
    %v148 = vld [vmem:[#allocation5 + $0x168] sm:$0xff]
    %v149 = vld [vmem:[#allocation5 + $0x170] sm:$0xff]
    %v150 = vld [vmem:[#allocation5 + $0x178] sm:$0xff]
    %v151 = vld [vmem:[#allocation7] sm:$0x3]
    %v153 = vperm.slane %v151, 0
    %v154 = vperm.slane %v151, 1
    %v159 = vunpack.c.l.b16 %v101
    %v160 = vunpack.c.h.b16 %v101
    %v161 = vunpack.c.l.b16 %v102
    %v162 = vpack.c.b16 %v159, %v159
    %v163 = vpack.c.b16 %v160, %v160
    %v164 = vpack.c.b16 %v161, %v161
    %v216 = vunpack.c.l.b16 %v103
    %v217 = vunpack.c.h.b16 %v103
    %v218 = vunpack.c.l.b16 %v104
    %v219 = vunpack.c.h.b16 %v104
    %v220 = vunpack.c.l.b16 %v105
    %v221 = vunpack.c.h.b16 %v105
    %v222 = vunpack.c.l.b16 %v106
    %v223 = vunpack.c.h.b16 %v106
    %v224 = vunpack.c.l.b16 %v107
    %v225 = vunpack.c.h.b16 %v107
    %v226 = vunpack.c.l.b16 %v108
    %v227 = vunpack.c.h.b16 %v108
    %v228 = vunpack.c.l.b16 %v109
    %v229 = vunpack.c.h.b16 %v109
    %v230 = vunpack.c.l.b16 %v110
    %v231 = vunpack.c.h.b16 %v110
    %v232 = vunpack.c.l.b16 %v111
    %v233 = vunpack.c.h.b16 %v111
    %v234 = vunpack.c.l.b16 %v112
    %v235 = vunpack.c.h.b16 %v112
    %v236 = vunpack.c.l.b16 %v113
    %v237 = vunpack.c.h.b16 %v113
    %v238 = vunpack.c.l.b16 %v114
    %v239 = vunpack.c.h.b16 %v114
    %v240 = vunpack.c.l.b16 %v115
    %v241 = vunpack.c.h.b16 %v115
    %v242 = vunpack.c.l.b16 %v116
    %v243 = vunpack.c.h.b16 %v116
    %v244 = vunpack.c.l.b16 %v117
    %v245 = vunpack.c.h.b16 %v117
    %v246 = vunpack.c.l.b16 %v118
    %v247 = vunpack.c.h.b16 %v118
    %v248 = vunpack.c.l.b16 %v119
    %v249 = vunpack.c.h.b16 %v119
    %v250 = vunpack.c.l.b16 %v120
    %v251 = vunpack.c.h.b16 %v120
    %v252 = vunpack.c.l.b16 %v121
    %v253 = vunpack.c.h.b16 %v121
    %v254 = vunpack.c.l.b16 %v122
    %v255 = vunpack.c.h.b16 %v122
    %v256 = vunpack.c.l.b16 %v123
    %v257 = vunpack.c.h.b16 %v123
    %v258 = vunpack.c.l.b16 %v124
    %v259 = vunpack.c.h.b16 %v124
    %v260 = vunpack.c.l.b16 %v125
    %v261 = vunpack.c.h.b16 %v125
    %v262 = vunpack.c.l.b16 %v126
    %v263 = vunpack.c.h.b16 %v126
    %v264 = vunpack.c.l.b16 %v127
    %v265 = vunpack.c.h.b16 %v127
    %v266 = vunpack.c.l.b16 %v128
    %v267 = vunpack.c.h.b16 %v128
    %v268 = vunpack.c.l.b16 %v129
    %v269 = vunpack.c.h.b16 %v129
    %v270 = vunpack.c.l.b16 %v130
    %v271 = vunpack.c.h.b16 %v130
    %v272 = vunpack.c.l.b16 %v131
    %v273 = vunpack.c.h.b16 %v131
    %v274 = vunpack.c.l.b16 %v132
    %v275 = vunpack.c.h.b16 %v132
    %v276 = vunpack.c.l.b16 %v133
    %v277 = vunpack.c.h.b16 %v133
    %v278 = vunpack.c.l.b16 %v134
    %v279 = vunpack.c.h.b16 %v134
    %v280 = vunpack.c.l.b16 %v135
    %v281 = vunpack.c.h.b16 %v135
    %v282 = vunpack.c.l.b16 %v136
    %v283 = vunpack.c.h.b16 %v136
    %v284 = vunpack.c.l.b16 %v137
    %v285 = vunpack.c.h.b16 %v137
    %v286 = vunpack.c.l.b16 %v138
    %v287 = vunpack.c.h.b16 %v138
    %v288 = vunpack.c.l.b16 %v139
    %v289 = vunpack.c.h.b16 %v139
    %v290 = vunpack.c.l.b16 %v140
    %v291 = vunpack.c.h.b16 %v140
    %v292 = vunpack.c.l.b16 %v141
    %v293 = vunpack.c.h.b16 %v141
    %v294 = vunpack.c.l.b16 %v142
    %v295 = vunpack.c.h.b16 %v142
    %v296 = vunpack.c.l.b16 %v143
    %v297 = vunpack.c.h.b16 %v143
    %v298 = vunpack.c.l.b16 %v144
    %v299 = vunpack.c.h.b16 %v144
    %v300 = vunpack.c.l.b16 %v145
    %v301 = vunpack.c.h.b16 %v145
    %v302 = vunpack.c.l.b16 %v146
    %v303 = vunpack.c.h.b16 %v146
    %v304 = vunpack.c.l.b16 %v147
    %v305 = vunpack.c.h.b16 %v147
    %v306 = vunpack.c.l.b16 %v148
    %v307 = vunpack.c.h.b16 %v148
    %v308 = vunpack.c.l.b16 %v149
    %v309 = vunpack.c.h.b16 %v149
    %v310 = vunpack.c.l.b16 %v150
    %v311 = vunpack.c.h.b16 %v150
    %v312 = vpack.c.b16 %v218, %v216
    %v313 = vpack.c.b16 %v219, %v217
    %v314 = vpack.c.b16 %v222, %v220
    %v315 = vpack.c.b16 %v223, %v221
    %v316 = vpack.c.b16 %v226, %v224
    %v317 = vpack.c.b16 %v227, %v225
    %v318 = vpack.c.b16 %v230, %v228
    %v319 = vpack.c.b16 %v231, %v229
    %v320 = vpack.c.b16 %v234, %v232
    %v321 = vpack.c.b16 %v235, %v233
    %v322 = vpack.c.b16 %v238, %v236
    %v323 = vpack.c.b16 %v239, %v237
    %v324 = vpack.c.b16 %v242, %v240
    %v325 = vpack.c.b16 %v243, %v241
    %v326 = vpack.c.b16 %v246, %v244
    %v327 = vpack.c.b16 %v247, %v245
    %v328 = vpack.c.b16 %v250, %v248
    %v329 = vpack.c.b16 %v251, %v249
    %v330 = vpack.c.b16 %v254, %v252
    %v331 = vpack.c.b16 %v255, %v253
    %v332 = vpack.c.b16 %v258, %v256
    %v333 = vpack.c.b16 %v259, %v257
    %v334 = vpack.c.b16 %v262, %v260
    %v335 = vpack.c.b16 %v263, %v261
    %v336 = vpack.c.b16 %v266, %v264
    %v337 = vpack.c.b16 %v267, %v265
    %v338 = vpack.c.b16 %v270, %v268
    %v339 = vpack.c.b16 %v271, %v269
    %v340 = vpack.c.b16 %v274, %v272
    %v341 = vpack.c.b16 %v275, %v273
    %v342 = vpack.c.b16 %v278, %v276
    %v343 = vpack.c.b16 %v279, %v277
    %v344 = vpack.c.b16 %v282, %v280
    %v345 = vpack.c.b16 %v283, %v281
    %v346 = vpack.c.b16 %v286, %v284
    %v347 = vpack.c.b16 %v287, %v285
    %v348 = vpack.c.b16 %v290, %v288
    %v349 = vpack.c.b16 %v291, %v289
    %v350 = vpack.c.b16 %v294, %v292
    %v351 = vpack.c.b16 %v295, %v293
    %v352 = vpack.c.b16 %v298, %v296
    %v353 = vpack.c.b16 %v299, %v297
    %v354 = vpack.c.b16 %v302, %v300
    %v355 = vpack.c.b16 %v303, %v301
    %v356 = vpack.c.b16 %v306, %v304
    %v357 = vpack.c.b16 %v307, %v305
    %v358 = vpack.c.b16 %v310, %v308
    %v359 = vpack.c.b16 %v311, %v309
    %408 = vmatpush.bf16.msra.mxu0 %v326
    %409 = vmatpush.bf16.msra.mxu0 %v324
    %410 = vmatpush.bf16.msra.mxu0 %v322
    %411 = vmatpush.bf16.msra.mxu0 %v320
    %412 = vmatpush.bf16.msra.mxu0 %v318
    %413 = vmatpush.bf16.msra.mxu0 %v316
    %414 = vmatpush.bf16.msra.mxu0 %v314
    %415 = vmatpush.bf16.msra.mxu0 %v312
    %416 = vmatmul.bf16.gmra.mxu0 %v162
    %v417 = vpop.f32.mrf.mxu0
    %v418 = vadd.f32 %v153, %v417
    %v419 = vpop.f32.mrf.mxu0
    %420 = vdwg.mxu0
    %421 = vmatpush.bf16.msra.mxu0 %v342
    %422 = vmatpush.bf16.msra.mxu0 %v340
    %423 = vmatpush.bf16.msra.mxu0 %v338
    %424 = vmatpush.bf16.msra.mxu0 %v336
    %425 = vmatpush.bf16.msra.mxu0 %v334
    %426 = vmatpush.bf16.msra.mxu0 %v332
    %427 = vmatpush.bf16.msra.mxu0 %v330
    %428 = vmatpush.bf16.msra.mxu0 %v328
    %429 = vmatmul.bf16.gmra.mxu0 %v163
    %v430 = vpop.f32.mrf.mxu0
    %v431 = vadd.f32 %v418, %v430
    %v432 = vpop.f32.mrf.mxu0
    %433 = vdwg.mxu0
    %434 = vmatpush.bf16.msra.mxu0 %v358
    %435 = vmatpush.bf16.msra.mxu0 %v356
    %436 = vmatpush.bf16.msra.mxu0 %v354
    %437 = vmatpush.bf16.msra.mxu0 %v352
    %438 = vmatpush.bf16.msra.mxu0 %v350
    %439 = vmatpush.bf16.msra.mxu0 %v348
    %440 = vmatpush.bf16.msra.mxu0 %v346
    %441 = vmatpush.bf16.msra.mxu0 %v344
    %442 = vmatmul.bf16.gmra.mxu0 %v164
    %v443 = vpop.f32.mrf.mxu0
    %v444 = vadd.f32 %v431, %v443
    %v445 = vpop.f32.mrf.mxu0
    %446 = vdwg.mxu0
    %447 = vmatpush.bf16.msra.mxu0 %v327
    %448 = vmatpush.bf16.msra.mxu0 %v325
    %449 = vmatpush.bf16.msra.mxu0 %v323
    %450 = vmatpush.bf16.msra.mxu0 %v321
    %451 = vmatpush.bf16.msra.mxu0 %v319
    %452 = vmatpush.bf16.msra.mxu0 %v317
    %453 = vmatpush.bf16.msra.mxu0 %v315
    %454 = vmatpush.bf16.msra.mxu0 %v313
    %455 = vmatmul.bf16.gmra.mxu0 %v162
    %v456 = vpop.f32.mrf.mxu0
    %v457 = vadd.f32 %v154, %v456
    %v458 = vpop.f32.mrf.mxu0
    %459 = vdwg.mxu0
    %460 = vmatpush.bf16.msra.mxu0 %v343
    %461 = vmatpush.bf16.msra.mxu0 %v341
    %462 = vmatpush.bf16.msra.mxu0 %v339
    %463 = vmatpush.bf16.msra.mxu0 %v337
    %464 = vmatpush.bf16.msra.mxu0 %v335
    %465 = vmatpush.bf16.msra.mxu0 %v333
    %466 = vmatpush.bf16.msra.mxu0 %v331
    %467 = vmatpush.bf16.msra.mxu0 %v329
    %468 = vmatmul.bf16.gmra.mxu0 %v163
    %v469 = vpop.f32.mrf.mxu0
    %v470 = vadd.f32 %v457, %v469
    %v471 = vpop.f32.mrf.mxu0
    %472 = vdwg.mxu0
    %473 = vmatpush.bf16.msra.mxu0 %v359
    %474 = vmatpush.bf16.msra.mxu0 %v357
    %475 = vmatpush.bf16.msra.mxu0 %v355
    %476 = vmatpush.bf16.msra.mxu0 %v353
    %477 = vmatpush.bf16.msra.mxu0 %v351
    %478 = vmatpush.bf16.msra.mxu0 %v349
    %479 = vmatpush.bf16.msra.mxu0 %v347
    %480 = vmatpush.bf16.msra.mxu0 %v345
    %481 = vmatmul.bf16.gmra.mxu0 %v164
    %v482 = vpop.f32.mrf.mxu0
    %v483 = vadd.f32 %v470, %v482
    %v484 = vpop.f32.mrf.mxu0
    %485 = vdwg.mxu0
    %vm486 = vcmp.gt.f32.partialorder %v444, 0.0
    %vm487 = vcmp.gt.f32.partialorder %v483, 0.0
    %v488 = vmul.f32 %v444, 0.2
    %v489 = vmul.f32 %v483, 0.2
    %v490 = vsel %vm486, %v444, %v488
    %v491 = vsel %vm487, %v483, %v489
    %v492 = vpack.c.bf16 %v490, %v490
    %v493 = vpack.c.bf16 %v491, %v491
    %v494 = vld [vmem:[#allocation8] sm:$0xff]
    %v495 = vld [vmem:[#allocation8 + $0x8] sm:$0xff]
    %v496 = vld [vmem:[#allocation8 + $0x10] sm:$0xff]
    %v497 = vld [vmem:[#allocation8 + $0x18] sm:$0xff]
    %v498 = vld [vmem:[#allocation8 + $0x20] sm:$0xff]
    %v499 = vld [vmem:[#allocation8 + $0x28] sm:$0xff]
    %v500 = vld [vmem:[#allocation8 + $0x30] sm:$0xff]
    %v501 = vld [vmem:[#allocation8 + $0x38] sm:$0xff]
    %v502 = vld [vmem:[#allocation8 + $0x40] sm:$0xff]
    %v503 = vld [vmem:[#allocation8 + $0x48] sm:$0xff]
    %v504 = vld [vmem:[#allocation8 + $0x50] sm:$0xff]
    %v505 = vld [vmem:[#allocation8 + $0x58] sm:$0xff]
    %v506 = vld [vmem:[#allocation8 + $0x60] sm:$0xff]
    %v507 = vld [vmem:[#allocation8 + $0x68] sm:$0xff]
    %v508 = vld [vmem:[#allocation8 + $0x70] sm:$0xff]
    %v509 = vld [vmem:[#allocation8 + $0x78] sm:$0xff]
    %v510 = vld [vmem:[#allocation8 + $0x80] sm:$0xff]
    %v511 = vld [vmem:[#allocation8 + $0x88] sm:$0xff]
    %v512 = vld [vmem:[#allocation8 + $0x90] sm:$0xff]
    %v513 = vld [vmem:[#allocation8 + $0x98] sm:$0xff]
    %v514 = vld [vmem:[#allocation8 + $0xa0] sm:$0xff]
    %v515 = vld [vmem:[#allocation8 + $0xa8] sm:$0xff]
    %v516 = vld [vmem:[#allocation8 + $0xb0] sm:$0xff]
    %v517 = vld [vmem:[#allocation8 + $0xb8] sm:$0xff]
    %v518 = vld [vmem:[#allocation8 + $0xc0] sm:$0xff]
    %v519 = vld [vmem:[#allocation8 + $0xc8] sm:$0xff]
    %v520 = vld [vmem:[#allocation8 + $0xd0] sm:$0xff]
    %v521 = vld [vmem:[#allocation8 + $0xd8] sm:$0xff]
    %v522 = vld [vmem:[#allocation8 + $0xe0] sm:$0xff]
    %v523 = vld [vmem:[#allocation8 + $0xe8] sm:$0xff]
    %v524 = vld [vmem:[#allocation8 + $0xf0] sm:$0xff]
    %v525 = vld [vmem:[#allocation8 + $0xf8] sm:$0xff]
    %v526 = vld [vmem:[%s4] sm:$0x3]
    %v528 = vperm.slane %v526, 0
    %v529 = vperm.slane %v526, 1
    %v564 = vunpack.c.l.b16 %v494
    %v565 = vunpack.c.h.b16 %v494
    %v566 = vunpack.c.l.b16 %v495
    %v567 = vunpack.c.h.b16 %v495
    %v568 = vunpack.c.l.b16 %v496
    %v569 = vunpack.c.h.b16 %v496
    %v570 = vunpack.c.l.b16 %v497
    %v571 = vunpack.c.h.b16 %v497
    %v572 = vunpack.c.l.b16 %v498
    %v573 = vunpack.c.h.b16 %v498
    %v574 = vunpack.c.l.b16 %v499
    %v575 = vunpack.c.h.b16 %v499
    %v576 = vunpack.c.l.b16 %v500
    %v577 = vunpack.c.h.b16 %v500
    %v578 = vunpack.c.l.b16 %v501
    %v579 = vunpack.c.h.b16 %v501
    %v580 = vunpack.c.l.b16 %v502
    %v581 = vunpack.c.h.b16 %v502
    %v582 = vunpack.c.l.b16 %v503
    %v583 = vunpack.c.h.b16 %v503
    %v584 = vunpack.c.l.b16 %v504
    %v585 = vunpack.c.h.b16 %v504
    %v586 = vunpack.c.l.b16 %v505
    %v587 = vunpack.c.h.b16 %v505
    %v588 = vunpack.c.l.b16 %v506
    %v589 = vunpack.c.h.b16 %v506
    %v590 = vunpack.c.l.b16 %v507
    %v591 = vunpack.c.h.b16 %v507
    %v592 = vunpack.c.l.b16 %v508
    %v593 = vunpack.c.h.b16 %v508
    %v594 = vunpack.c.l.b16 %v509
    %v595 = vunpack.c.h.b16 %v509
    %v596 = vunpack.c.l.b16 %v510
    %v597 = vunpack.c.h.b16 %v510
    %v598 = vunpack.c.l.b16 %v511
    %v599 = vunpack.c.h.b16 %v511
    %v600 = vunpack.c.l.b16 %v512
    %v601 = vunpack.c.h.b16 %v512
    %v602 = vunpack.c.l.b16 %v513
    %v603 = vunpack.c.h.b16 %v513
    %v604 = vunpack.c.l.b16 %v514
    %v605 = vunpack.c.h.b16 %v514
    %v606 = vunpack.c.l.b16 %v515
    %v607 = vunpack.c.h.b16 %v515
    %v608 = vunpack.c.l.b16 %v516
    %v609 = vunpack.c.h.b16 %v516
    %v610 = vunpack.c.l.b16 %v517
    %v611 = vunpack.c.h.b16 %v517
    %v612 = vunpack.c.l.b16 %v518
    %v613 = vunpack.c.h.b16 %v518
    %v614 = vunpack.c.l.b16 %v519
    %v615 = vunpack.c.h.b16 %v519
    %v616 = vunpack.c.l.b16 %v520
    %v617 = vunpack.c.h.b16 %v520
    %v618 = vunpack.c.l.b16 %v521
    %v619 = vunpack.c.h.b16 %v521
    %v620 = vunpack.c.l.b16 %v522
    %v621 = vunpack.c.h.b16 %v522
    %v622 = vunpack.c.l.b16 %v523
    %v623 = vunpack.c.h.b16 %v523
    %v624 = vunpack.c.l.b16 %v524
    %v625 = vunpack.c.h.b16 %v524
    %v626 = vunpack.c.l.b16 %v525
    %v627 = vunpack.c.h.b16 %v525
    %v628 = vpack.c.b16 %v566, %v564
    %v629 = vpack.c.b16 %v567, %v565
    %v630 = vpack.c.b16 %v570, %v568
    %v631 = vpack.c.b16 %v571, %v569
    %v632 = vpack.c.b16 %v574, %v572
    %v633 = vpack.c.b16 %v575, %v573
    %v634 = vpack.c.b16 %v578, %v576
    %v635 = vpack.c.b16 %v579, %v577
    %v636 = vpack.c.b16 %v582, %v580
    %v637 = vpack.c.b16 %v583, %v581
    %v638 = vpack.c.b16 %v586, %v584
    %v639 = vpack.c.b16 %v587, %v585
    %v640 = vpack.c.b16 %v590, %v588
    %v641 = vpack.c.b16 %v591, %v589
    %v642 = vpack.c.b16 %v594, %v592
    %v643 = vpack.c.b16 %v595, %v593
    %v644 = vpack.c.b16 %v598, %v596
    %v645 = vpack.c.b16 %v599, %v597
    %v646 = vpack.c.b16 %v602, %v600
    %v647 = vpack.c.b16 %v603, %v601
    %v648 = vpack.c.b16 %v606, %v604
    %v649 = vpack.c.b16 %v607, %v605
    %v650 = vpack.c.b16 %v610, %v608
    %v651 = vpack.c.b16 %v611, %v609
    %v652 = vpack.c.b16 %v614, %v612
    %v653 = vpack.c.b16 %v615, %v613
    %v654 = vpack.c.b16 %v618, %v616
    %v655 = vpack.c.b16 %v619, %v617
    %v656 = vpack.c.b16 %v622, %v620
    %v657 = vpack.c.b16 %v623, %v621
    %v658 = vpack.c.b16 %v626, %v624
    %v659 = vpack.c.b16 %v627, %v625
    %692 = vmatpush.bf16.msra.mxu0 %v642
    %693 = vmatpush.bf16.msra.mxu0 %v640
    %694 = vmatpush.bf16.msra.mxu0 %v638
    %695 = vmatpush.bf16.msra.mxu0 %v636
    %696 = vmatpush.bf16.msra.mxu0 %v634
    %697 = vmatpush.bf16.msra.mxu0 %v632
    %698 = vmatpush.bf16.msra.mxu0 %v630
    %699 = vmatpush.bf16.msra.mxu0 %v628
    %700 = vmatmul.bf16.gmra.mxu0 %v492
    %v701 = vpop.f32.mrf.mxu0
    %v702 = vadd.f32 %v528, %v701
    %v703 = vpop.f32.mrf.mxu0
    %704 = vdwg.mxu0
    %705 = vmatpush.bf16.msra.mxu0 %v658
    %706 = vmatpush.bf16.msra.mxu0 %v656
    %707 = vmatpush.bf16.msra.mxu0 %v654
    %708 = vmatpush.bf16.msra.mxu0 %v652
    %709 = vmatpush.bf16.msra.mxu0 %v650
    %710 = vmatpush.bf16.msra.mxu0 %v648
    %711 = vmatpush.bf16.msra.mxu0 %v646
    %712 = vmatpush.bf16.msra.mxu0 %v644
    %713 = vmatmul.bf16.gmra.mxu0 %v493
    %v714 = vpop.f32.mrf.mxu0
    %v715 = vadd.f32 %v702, %v714
    %v716 = vpop.f32.mrf.mxu0
    %717 = vdwg.mxu0
    %718 = vmatpush.bf16.msra.mxu0 %v643
    %719 = vmatpush.bf16.msra.mxu0 %v641
    %720 = vmatpush.bf16.msra.mxu0 %v639
    %721 = vmatpush.bf16.msra.mxu0 %v637
    %722 = vmatpush.bf16.msra.mxu0 %v635
    %723 = vmatpush.bf16.msra.mxu0 %v633
    %724 = vmatpush.bf16.msra.mxu0 %v631
    %725 = vmatpush.bf16.msra.mxu0 %v629
    %726 = vmatmul.bf16.gmra.mxu0 %v492
    %v727 = vpop.f32.mrf.mxu0
    %v728 = vadd.f32 %v529, %v727
    %v729 = vpop.f32.mrf.mxu0
    %730 = vdwg.mxu0
    %731 = vmatpush.bf16.msra.mxu0 %v659
    %732 = vmatpush.bf16.msra.mxu0 %v657
    %733 = vmatpush.bf16.msra.mxu0 %v655
    %734 = vmatpush.bf16.msra.mxu0 %v653
    %735 = vmatpush.bf16.msra.mxu0 %v651
    %736 = vmatpush.bf16.msra.mxu0 %v649
    %737 = vmatpush.bf16.msra.mxu0 %v647
    %738 = vmatpush.bf16.msra.mxu0 %v645
    %739 = vmatmul.bf16.gmra.mxu0 %v493
    %v740 = vpop.f32.mrf.mxu0
    %v741 = vadd.f32 %v728, %v740
    %v742 = vpop.f32.mrf.mxu0
    %743 = vdwg.mxu0
    %vm744 = vcmp.gt.f32.partialorder %v715, 0.0
    %vm745 = vcmp.gt.f32.partialorder %v741, 0.0
    %v746 = vmul.f32 %v715, 0.2
    %v747 = vmul.f32 %v741, 0.2
    %v748 = vsel %vm744, %v715, %v746
    %v749 = vsel %vm745, %v741, %v747
    %v750 = vpack.c.bf16 %v748, %v748
    %v751 = vpack.c.bf16 %v749, %v749
    %v752 = vld [vmem:[#allocation10] sm:$0xf]
    %v753 = vld [vmem:[#allocation10 + $0x4] sm:$0xf]
    %v754 = vld [vmem:[#allocation10 + $0x8] sm:$0xf]
    %v755 = vld [vmem:[#allocation10 + $0xc] sm:$0xf]
    %v756 = vld [vmem:[#allocation10 + $0x10] sm:$0xf]
    %v757 = vld [vmem:[#allocation10 + $0x14] sm:$0xf]
    %v758 = vld [vmem:[#allocation10 + $0x18] sm:$0xf]
    %v759 = vld [vmem:[#allocation10 + $0x1c] sm:$0xf]
    %v760 = vld [vmem:[#allocation10 + $0x20] sm:$0xf]
    %v761 = vld [vmem:[#allocation10 + $0x24] sm:$0xf]
    %v762 = vld [vmem:[#allocation10 + $0x28] sm:$0xf]
    %v763 = vld [vmem:[#allocation10 + $0x2c] sm:$0xf]
    %v764 = vld [vmem:[#allocation10 + $0x30] sm:$0xf]
    %v765 = vld [vmem:[#allocation10 + $0x34] sm:$0xf]
    %v766 = vld [vmem:[#allocation10 + $0x38] sm:$0xf]
    %v767 = vld [vmem:[#allocation10 + $0x3c] sm:$0xf]
    %v768 = vld [vmem:[#allocation10 + $0x40] sm:$0xf]
    %v769 = vld [vmem:[#allocation10 + $0x44] sm:$0xf]
    %v770 = vld [vmem:[#allocation10 + $0x48] sm:$0xf]
    %v771 = vld [vmem:[#allocation10 + $0x4c] sm:$0xf]
    %v772 = vld [vmem:[#allocation10 + $0x50] sm:$0xf]
    %v773 = vld [vmem:[#allocation10 + $0x54] sm:$0xf]
    %v774 = vld [vmem:[#allocation10 + $0x58] sm:$0xf]
    %v775 = vld [vmem:[#allocation10 + $0x5c] sm:$0xf]
    %v776 = vld [vmem:[#allocation10 + $0x60] sm:$0xf]
    %v777 = vld [vmem:[#allocation10 + $0x64] sm:$0xf]
    %v778 = vld [vmem:[#allocation10 + $0x68] sm:$0xf]
    %v779 = vld [vmem:[#allocation10 + $0x6c] sm:$0xf]
    %v780 = vld [vmem:[#allocation10 + $0x70] sm:$0xf]
    %v781 = vld [vmem:[#allocation10 + $0x74] sm:$0xf]
    %v782 = vld [vmem:[#allocation10 + $0x78] sm:$0xf]
    %v783 = vld [vmem:[#allocation10 + $0x7c] sm:$0xf]
    %v784 = vld [vmem:[%s6] sm:$0x1]
    %v786 = vperm.slane %v784, 0
    %v820 = vunpack.c.l.b16 %v752
    %v821 = vunpack.c.l.b16 %v753
    %v822 = vunpack.c.l.b16 %v754
    %v823 = vunpack.c.l.b16 %v755
    %v824 = vunpack.c.l.b16 %v756
    %v825 = vunpack.c.l.b16 %v757
    %v826 = vunpack.c.l.b16 %v758
    %v827 = vunpack.c.l.b16 %v759
    %v828 = vunpack.c.l.b16 %v760
    %v829 = vunpack.c.l.b16 %v761
    %v830 = vunpack.c.l.b16 %v762
    %v831 = vunpack.c.l.b16 %v763
    %v832 = vunpack.c.l.b16 %v764
    %v833 = vunpack.c.l.b16 %v765
    %v834 = vunpack.c.l.b16 %v766
    %v835 = vunpack.c.l.b16 %v767
    %v836 = vunpack.c.l.b16 %v768
    %v837 = vunpack.c.l.b16 %v769
    %v838 = vunpack.c.l.b16 %v770
    %v839 = vunpack.c.l.b16 %v771
    %v840 = vunpack.c.l.b16 %v772
    %v841 = vunpack.c.l.b16 %v773
    %v842 = vunpack.c.l.b16 %v774
    %v843 = vunpack.c.l.b16 %v775
    %v844 = vunpack.c.l.b16 %v776
    %v845 = vunpack.c.l.b16 %v777
    %v846 = vunpack.c.l.b16 %v778
    %v847 = vunpack.c.l.b16 %v779
    %v848 = vunpack.c.l.b16 %v780
    %v849 = vunpack.c.l.b16 %v781
    %v850 = vunpack.c.l.b16 %v782
    %v851 = vunpack.c.l.b16 %v783
    %v852 = vpack.c.b16 %v821, %v820
    %v853 = vpack.c.b16 %v823, %v822
    %v854 = vpack.c.b16 %v825, %v824
    %v855 = vpack.c.b16 %v827, %v826
    %v856 = vpack.c.b16 %v829, %v828
    %v857 = vpack.c.b16 %v831, %v830
    %v858 = vpack.c.b16 %v833, %v832
    %v859 = vpack.c.b16 %v835, %v834
    %v860 = vpack.c.b16 %v837, %v836
    %v861 = vpack.c.b16 %v839, %v838
    %v862 = vpack.c.b16 %v841, %v840
    %v863 = vpack.c.b16 %v843, %v842
    %v864 = vpack.c.b16 %v845, %v844
    %v865 = vpack.c.b16 %v847, %v846
    %v866 = vpack.c.b16 %v849, %v848
    %v867 = vpack.c.b16 %v851, %v850
    %884 = vmatpush.bf16.msra.mxu0 %v859
    %885 = vmatpush.bf16.msra.mxu0 %v858
    %886 = vmatpush.bf16.msra.mxu0 %v857
    %887 = vmatpush.bf16.msra.mxu0 %v856
    %888 = vmatpush.bf16.msra.mxu0 %v855
    %889 = vmatpush.bf16.msra.mxu0 %v854
    %890 = vmatpush.bf16.msra.mxu0 %v853
    %891 = vmatpush.bf16.msra.mxu0 %v852
    %892 = vmatmul.bf16.gmra.mxu0 %v750
    %v893 = vpop.f32.mrf.mxu0
    %v894 = vadd.f32 %v786, %v893
    %v895 = vpop.f32.mrf.mxu0
    %896 = vdwg.mxu0
    %897 = vmatpush.bf16.msra.mxu0 %v867
    %898 = vmatpush.bf16.msra.mxu0 %v866
    %899 = vmatpush.bf16.msra.mxu0 %v865
    %900 = vmatpush.bf16.msra.mxu0 %v864
    %901 = vmatpush.bf16.msra.mxu0 %v863
    %902 = vmatpush.bf16.msra.mxu0 %v862
    %903 = vmatpush.bf16.msra.mxu0 %v861
    %904 = vmatpush.bf16.msra.mxu0 %v860
    %905 = vmatmul.bf16.gmra.mxu0 %v751
    %v906 = vpop.f32.mrf.mxu0
    %v907 = vadd.f32 %v894, %v906
    %v908 = vpop.f32.mrf.mxu0
    %909 = vdwg.mxu0
    %v910 = vtanh.pop %v907
    %v911 = vpack.c.bf16 %v910, %v910
    %912 = vst [vmem:[#allocation11] sm:$0xf] %v911
    // Predicated region
    $region50: #{tpu_custom_call.1} parent=1 // pred_check
      _
    $region51: #{tpu_custom_call.1} parent=1 // pred_check_branch
      %914 = sbr.rel (0) target = $region53
    $region52: #{tpu_custom_call.1} parent=1 // pred_region
      %916 = vsyncadd [#allocation4], 0
      %s918 = sshll.u32 [#allocation11], 4
      %s919 = int_to_ptr.vmem [resolvable:$true] %s918
      %s920 = sshll.u32 %s7, 4
      %s921 = int_to_ptr.hbm [resolvable:$true] %s920
      %923 = dma.vmem_to_hbm [thread:$0]  %s919, 64, %s921, [#allocation4]
    $region53: #{tpu_custom_call.1} parent=1 // pred_fallthru
      _
    // Predicated region
    $region54: #{tpu_custom_call.1} parent=1 // pred_check
      _
    $region55: #{tpu_custom_call.1} parent=1 // pred_check_branch
      %925 = sbr.rel (0) target = $region57
    $region56: #{tpu_custom_call.1} parent=1 // pred_region
      %927 = dma.done [#allocation4], 64
    $region57: #{tpu_custom_call.1} parent=1 // pred_fallthru
      _
    %928 = vsyncpa [#allocation3], 1
    %929 = vsyncpa [#allocation6], 1
    %930 = vsyncpa [#allocation9], 1
    %931 = vsyncpa [#allocation4], 1

// kernel: tpu_custom_call.1
$region0: #{tpu_custom_call.1}
  #allocation0 [shape = 'u32[]', space=smem, size = 0x4, offset = 0x4, fixed_abs, tag = 'smem constant byte address 0x4 - core index']
  #allocation1 [shape = 'u32[72,128]{1,0:T(1,128)}', space=vmem, size = 0x9000, scoped, tag = 'internal scratch']
  %s0 = inlined_call_operand.hbm [shape: bf16[8,384], index: 0, kind: input, shape index: {}]
  %s1 = inlined_call_operand.hbm [shape: bf16[384,256], index: 1, kind: input, shape index: {}]
  %s2 = inlined_call_operand.hbm [shape: f32[1,256], index: 2, kind: input, shape index: {}]
  %s3 = inlined_call_operand.hbm [shape: bf16[256,256], index: 3, kind: input, shape index: {}]
  %s4 = inlined_call_operand.vmem [shape: f32[1,256], index: 4, kind: input, shape index: {}]
  %s5 = inlined_call_operand.hbm [shape: bf16[256,128], index: 5, kind: input, shape index: {}]
  %s6 = inlined_call_operand.vmem [shape: f32[1,128], index: 6, kind: input, shape index: {}]
  %s7 = inlined_call_operand.hbm [shape: bf16[8,128], index: 7, kind: output, shape index: {}]
  %s8 = sld [smem:[#allocation0]]
  $region58: #{tpu_custom_call.1} parent=0
    _
  %s10 = ssub.s32 1, %s8
  %s11 = scalar_select 0, %s10, %s8
  $region1: #{tpu_custom_call.1} parent=0
    #allocation2 [shape = 'u8[6144]{0}', space=vmem, size = 0x1800, scoped, tag = 'input window, operand 0, single buffered']
    #allocation3 [shape = 's32[1]{0}', space=sflag, size = 0x4, scoped, tag = 'scoped memory for tpu_custom_call.1']
    #allocation4 [shape = 's32[1]{0}', space=sflag, size = 0x4, scoped, tag = 'scoped memory for tpu_custom_call.1']
    #allocation5 [shape = 'u8[196608]{0}', space=vmem, size = 0x30000, scoped, tag = 'input window, operand 1, single buffered']
    #allocation6 [shape = 's32[1]{0}', space=sflag, size = 0x4, scoped, tag = 'scoped memory for tpu_custom_call.1']
    #allocation7 [shape = 'u8[1024]{0}', space=vmem, size = 0x400, scoped, tag = 'input window, operand 2, single buffered']
    #allocation8 [shape = 'u8[131072]{0}', space=vmem, size = 0x20000, scoped, tag = 'input window, operand 3, single buffered']
    #allocation9 [shape = 's32[1]{0}', space=sflag, size = 0x4, scoped, tag = 'scoped memory for tpu_custom_call.1']
    #allocation10 [shape = 'u8[65536]{0}', space=vmem, size = 0x10000, scoped, tag = 'input window, operand 5, single buffered']
    #allocation11 [shape = 'u8[2048]{0}', space=vmem, size = 0x800, scoped, tag = 'output window, operand 0, single buffered']
    %12 = vsyncpa [#allocation3], 0
    %13 = vsyncpa [#allocation6], 0
    %14 = vsyncpa [#allocation9], 0
    %15 = vsyncpa [#allocation4], 0
    // Predicated region
    $region2: #{tpu_custom_call.1} parent=1 // pred_check
      _
    $region3: #{tpu_custom_call.1} parent=1 // pred_check_branch
      %17 = sbr.rel (0) target = $region5
    $region4: #{tpu_custom_call.1} parent=1 // pred_region
      %19 = vsyncadd [#allocation3], 0
      %s21 = sshll.u32 %s0, 4
      %s22 = int_to_ptr.hbm [resolvable:$true] %s21
      %s23 = sshll.u32 [#allocation2], 4
      %s24 = int_to_ptr.vmem [resolvable:$true] %s23
      %26 = dma.hbm_to_vmem [thread:$0]  %s22, 192, %s24, [#allocation3]
    $region5: #{tpu_custom_call.1} parent=1 // pred_fallthru
      _
    // Predicated region
    $region6: #{tpu_custom_call.1} parent=1 // pred_check
      _
    $region7: #{tpu_custom_call.1} parent=1 // pred_check_branch
      %28 = sbr.rel (0) target = $region9
    $region8: #{tpu_custom_call.1} parent=1 // pred_region
      %30 = vsyncadd [#allocation6], 0
      %s31 = sshll.u32 %s1, 4
      %s32 = int_to_ptr.hbm [resolvable:$true] %s31
      %s33 = sshll.u32 [#allocation5], 4
      %s34 = int_to_ptr.vmem [resolvable:$true] %s33
      %39 = dma.hbm_to_vmem [thread:$0]  %s32, 6144, %s34, [#allocation6], 128, 128, 8
    $region9: #{tpu_custom_call.1} parent=1 // pred_fallthru
      _
    // Predicated region
    $region10: #{tpu_custom_call.1} parent=1 // pred_check
      _
    $region11: #{tpu_custom_call.1} parent=1 // pred_check_branch
      %41 = sbr.rel (0) target = $region13
    $region12: #{tpu_custom_call.1} parent=1 // pred_region
      %43 = vsyncadd [#allocation6], 0
      %s45 = sshll.u32 %s2, 4
      %s46 = int_to_ptr.hbm [resolvable:$true] %s45
      %s47 = sshll.u32 [#allocation7], 4
      %s48 = int_to_ptr.vmem [resolvable:$true] %s47
      %50 = dma.hbm_to_vmem [thread:$0]  %s46, 32, %s48, [#allocation6]
    $region13: #{tpu_custom_call.1} parent=1 // pred_fallthru
      _
    // Predicated region
    $region14: #{tpu_custom_call.1} parent=1 // pred_check
      _
    $region15: #{tpu_custom_call.1} parent=1 // pred_check_branch
      %52 = sbr.rel (0) target = $region17
    $region16: #{tpu_custom_call.1} parent=1 // pred_region
      %54 = vsyncadd [#allocation9], 0
      %s55 = sshll.u32 %s3, 4
      %s56 = int_to_ptr.hbm [resolvable:$true] %s55
      %s57 = sshll.u32 [#allocation8], 4
      %s58 = int_to_ptr.vmem [resolvable:$true] %s57
      %63 = dma.hbm_to_vmem [thread:$0]  %s56, 4096, %s58, [#allocation9], 128, 128, 8
    $region17: #{tpu_custom_call.1} parent=1 // pred_fallthru
      _
    // Predicated region
    $region18: #{tpu_custom_call.1} parent=1 // pred_check
      _
    $region19: #{tpu_custom_call.1} parent=1 // pred_check_branch
      %65 = sbr.rel (0) target = $region21
    $region20: #{tpu_custom_call.1} parent=1 // pred_region
      _
    $region21: #{tpu_custom_call.1} parent=1 // pred_fallthru
      _
    // Predicated region
    $region22: #{tpu_custom_call.1} parent=1 // pred_check
      _
    $region23: #{tpu_custom_call.1} parent=1 // pred_check_branch
      %67 = sbr.rel (0) target = $region25
    $region24: #{tpu_custom_call.1} parent=1 // pred_region
      %69 = vsyncadd [#allocation9], 0
      %s70 = sshll.u32 %s5, 4
      %s71 = int_to_ptr.hbm [resolvable:$true] %s70
      %s72 = sshll.u32 [#allocation10], 4
      %s73 = int_to_ptr.vmem [resolvable:$true] %s72
      %78 = dma.hbm_to_vmem [thread:$0]  %s71, 2048, %s73, [#allocation9], 64, 64, 4
    $region25: #{tpu_custom_call.1} parent=1 // pred_fallthru
      _
    // Predicated region
    $region26: #{tpu_custom_call.1} parent=1 // pred_check
      _
    $region27: #{tpu_custom_call.1} parent=1 // pred_check_branch
      %80 = sbr.rel (0) target = $region29
    $region28: #{tpu_custom_call.1} parent=1 // pred_region
      _
    $region29: #{tpu_custom_call.1} parent=1 // pred_fallthru
      _
    // Predicated region
    $region30: #{tpu_custom_call.1} parent=1 // pred_check
      _
    $region31: #{tpu_custom_call.1} parent=1 // pred_check_branch
      %82 = sbr.rel (0) target = $region33
    $region32: #{tpu_custom_call.1} parent=1 // pred_region
      %84 = dma.done [#allocation3], 192
    $region33: #{tpu_custom_call.1} parent=1 // pred_fallthru
      _
    // Predicated region
    $region34: #{tpu_custom_call.1} parent=1 // pred_check
      _
    $region35: #{tpu_custom_call.1} parent=1 // pred_check_branch
      %86 = sbr.rel (0) target = $region37
    $region36: #{tpu_custom_call.1} parent=1 // pred_region
      %88 = dma.done [#allocation6], 6144
    $region37: #{tpu_custom_call.1} parent=1 // pred_fallthru
      _
    // Predicated region
    $region38: #{tpu_custom_call.1} parent=1 // pred_check
      _
    $region39: #{tpu_custom_call.1} parent=1 // pred_check_branch
      %90 = sbr.rel (0) target = $region41
    $region40: #{tpu_custom_call.1} parent=1 // pred_region
      %92 = dma.done [#allocation6], 32
    $region41: #{tpu_custom_call.1} parent=1 // pred_fallthru
      _
    // Predicated region
    $region42: #{tpu_custom_call.1} parent=1 // pred_check
      _
    $region43: #{tpu_custom_call.1} parent=1 // pred_check_branch
      %94 = sbr.rel (0) target = $region45
    $region44: #{tpu_custom_call.1} parent=1 // pred_region
      %96 = dma.done [#allocation9], 4096
    $region45: #{tpu_custom_call.1} parent=1 // pred_fallthru
      _
    // Predicated region
    $region46: #{tpu_custom_call.1} parent=1 // pred_check
      _
    $region47: #{tpu_custom_call.1} parent=1 // pred_check_branch
      %98 = sbr.rel (0) target = $region49
    $region48: #{tpu_custom_call.1} parent=1 // pred_region
      %100 = dma.done [#allocation9], 2048
    $region49: #{tpu_custom_call.1} parent=1 // pred_fallthru
      _
    %v101 = vld [vmem:[#allocation2] sm:$0xff]
    %v102 = vld [vmem:[#allocation2 + $0x8] sm:$0xf]
    %v103 = vld [vmem:[#allocation5] sm:$0xff]
    %v104 = vld [vmem:[#allocation5 + $0x8] sm:$0xff]
    %v105 = vld [vmem:[#allocation5 + $0x10] sm:$0xff]
    %v106 = vld [vmem:[#allocation5 + $0x18] sm:$0xff]
    %v107 = vld [vmem:[#allocation5 + $0x20] sm:$0xff]
    %v108 = vld [vmem:[#allocation5 + $0x28] sm:$0xff]
    %v109 = vld [vmem:[#allocation5 + $0x30] sm:$0xff]
    %v110 = vld [vmem:[#allocation5 + $0x38] sm:$0xff]
    %v111 = vld [vmem:[#allocation5 + $0x40] sm:$0xff]
    %v112 = vld [vmem:[#allocation5 + $0x48] sm:$0xff]
    %v113 = vld [vmem:[#allocation5 + $0x50] sm:$0xff]
    %v114 = vld [vmem:[#allocation5 + $0x58] sm:$0xff]
    %v115 = vld [vmem:[#allocation5 + $0x60] sm:$0xff]
    %v116 = vld [vmem:[#allocation5 + $0x68] sm:$0xff]
    %v117 = vld [vmem:[#allocation5 + $0x70] sm:$0xff]
    %v118 = vld [vmem:[#allocation5 + $0x78] sm:$0xff]
    %v119 = vld [vmem:[#allocation5 + $0x80] sm:$0xff]
    %v120 = vld [vmem:[#allocation5 + $0x88] sm:$0xff]
    %v121 = vld [vmem:[#allocation5 + $0x90] sm:$0xff]
    %v122 = vld [vmem:[#allocation5 + $0x98] sm:$0xff]
    %v123 = vld [vmem:[#allocation5 + $0xa0] sm:$0xff]
    %v124 = vld [vmem:[#allocation5 + $0xa8] sm:$0xff]
    %v125 = vld [vmem:[#allocation5 + $0xb0] sm:$0xff]
    %v126 = vld [vmem:[#allocation5 + $0xb8] sm:$0xff]
    %v127 = vld [vmem:[#allocation5 + $0xc0] sm:$0xff]
    %v128 = vld [vmem:[#allocation5 + $0xc8] sm:$0xff]
    %v129 = vld [vmem:[#allocation5 + $0xd0] sm:$0xff]
    %v130 = vld [vmem:[#allocation5 + $0xd8] sm:$0xff]
    %v131 = vld [vmem:[#allocation5 + $0xe0] sm:$0xff]
    %v132 = vld [vmem:[#allocation5 + $0xe8] sm:$0xff]
    %v133 = vld [vmem:[#allocation5 + $0xf0] sm:$0xff]
    %v134 = vld [vmem:[#allocation5 + $0xf8] sm:$0xff]
    %v135 = vld [vmem:[#allocation5 + $0x100] sm:$0xff]
    %v136 = vld [vmem:[#allocation5 + $0x108] sm:$0xff]
    %v137 = vld [vmem:[#allocation5 + $0x110] sm:$0xff]
    %v138 = vld [vmem:[#allocation5 + $0x118] sm:$0xff]
    %v139 = vld [vmem:[#allocation5 + $0x120] sm:$0xff]
    %v140 = vld [vmem:[#allocation5 + $0x128] sm:$0xff]
    %v141 = vld [vmem:[#allocation5 + $0x130] sm:$0xff]
    %v142 = vld [vmem:[#allocation5 + $0x138] sm:$0xff]
    %v143 = vld [vmem:[#allocation5 + $0x140] sm:$0xff]
    %v144 = vld [vmem:[#allocation5 + $0x148] sm:$0xff]
    %v145 = vld [vmem:[#allocation5 + $0x150] sm:$0xff]
    %v146 = vld [vmem:[#allocation5 + $0x158] sm:$0xff]
    %v147 = vld [vmem:[#allocation5 + $0x160] sm:$0xff]
    %v148 = vld [vmem:[#allocation5 + $0x168] sm:$0xff]
    %v149 = vld [vmem:[#allocation5 + $0x170] sm:$0xff]
    %v150 = vld [vmem:[#allocation5 + $0x178] sm:$0xff]
    %v151 = vld [vmem:[#allocation7] sm:$0x3]
    %v153 = vperm.slane %v151, 0
    %v154 = vperm.slane %v151, 1
    %v159 = vunpack.c.l.b16 %v101
    %v160 = vunpack.c.h.b16 %v101
    %v161 = vunpack.c.l.b16 %v102
    %v162 = vpack.c.b16 %v159, %v159
    %v163 = vpack.c.b16 %v160, %v160
    %v164 = vpack.c.b16 %v161, %v161
    %v216 = vunpack.c.l.b16 %v103
    %v217 = vunpack.c.h.b16 %v103
    %v218 = vunpack.c.l.b16 %v104
    %v219 = vunpack.c.h.b16 %v104
    %v220 = vunpack.c.l.b16 %v105
    %v221 = vunpack.c.h.b16 %v105
    %v222 = vunpack.c.l.b16 %v106
    %v223 = vunpack.c.h.b16 %v106
    %v224 = vunpack.c.l.b16 %v107
    %v225 = vunpack.c.h.b16 %v107
    %v226 = vunpack.c.l.b16 %v108
    %v227 = vunpack.c.h.b16 %v108
    %v228 = vunpack.c.l.b16 %v109
    %v229 = vunpack.c.h.b16 %v109
    %v230 = vunpack.c.l.b16 %v110
    %v231 = vunpack.c.h.b16 %v110
    %v232 = vunpack.c.l.b16 %v111
    %v233 = vunpack.c.h.b16 %v111
    %v234 = vunpack.c.l.b16 %v112
    %v235 = vunpack.c.h.b16 %v112
    %v236 = vunpack.c.l.b16 %v113
    %v237 = vunpack.c.h.b16 %v113
    %v238 = vunpack.c.l.b16 %v114
    %v239 = vunpack.c.h.b16 %v114
    %v240 = vunpack.c.l.b16 %v115
    %v241 = vunpack.c.h.b16 %v115
    %v242 = vunpack.c.l.b16 %v116
    %v243 = vunpack.c.h.b16 %v116
    %v244 = vunpack.c.l.b16 %v117
    %v245 = vunpack.c.h.b16 %v117
    %v246 = vunpack.c.l.b16 %v118
    %v247 = vunpack.c.h.b16 %v118
    %v248 = vunpack.c.l.b16 %v119
    %v249 = vunpack.c.h.b16 %v119
    %v250 = vunpack.c.l.b16 %v120
    %v251 = vunpack.c.h.b16 %v120
    %v252 = vunpack.c.l.b16 %v121
    %v253 = vunpack.c.h.b16 %v121
    %v254 = vunpack.c.l.b16 %v122
    %v255 = vunpack.c.h.b16 %v122
    %v256 = vunpack.c.l.b16 %v123
    %v257 = vunpack.c.h.b16 %v123
    %v258 = vunpack.c.l.b16 %v124
    %v259 = vunpack.c.h.b16 %v124
    %v260 = vunpack.c.l.b16 %v125
    %v261 = vunpack.c.h.b16 %v125
    %v262 = vunpack.c.l.b16 %v126
    %v263 = vunpack.c.h.b16 %v126
    %v264 = vunpack.c.l.b16 %v127
    %v265 = vunpack.c.h.b16 %v127
    %v266 = vunpack.c.l.b16 %v128
    %v267 = vunpack.c.h.b16 %v128
    %v268 = vunpack.c.l.b16 %v129
    %v269 = vunpack.c.h.b16 %v129
    %v270 = vunpack.c.l.b16 %v130
    %v271 = vunpack.c.h.b16 %v130
    %v272 = vunpack.c.l.b16 %v131
    %v273 = vunpack.c.h.b16 %v131
    %v274 = vunpack.c.l.b16 %v132
    %v275 = vunpack.c.h.b16 %v132
    %v276 = vunpack.c.l.b16 %v133
    %v277 = vunpack.c.h.b16 %v133
    %v278 = vunpack.c.l.b16 %v134
    %v279 = vunpack.c.h.b16 %v134
    %v280 = vunpack.c.l.b16 %v135
    %v281 = vunpack.c.h.b16 %v135
    %v282 = vunpack.c.l.b16 %v136
    %v283 = vunpack.c.h.b16 %v136
    %v284 = vunpack.c.l.b16 %v137
    %v285 = vunpack.c.h.b16 %v137
    %v286 = vunpack.c.l.b16 %v138
    %v287 = vunpack.c.h.b16 %v138
    %v288 = vunpack.c.l.b16 %v139
    %v289 = vunpack.c.h.b16 %v139
    %v290 = vunpack.c.l.b16 %v140
    %v291 = vunpack.c.h.b16 %v140
    %v292 = vunpack.c.l.b16 %v141
    %v293 = vunpack.c.h.b16 %v141
    %v294 = vunpack.c.l.b16 %v142
    %v295 = vunpack.c.h.b16 %v142
    %v296 = vunpack.c.l.b16 %v143
    %v297 = vunpack.c.h.b16 %v143
    %v298 = vunpack.c.l.b16 %v144
    %v299 = vunpack.c.h.b16 %v144
    %v300 = vunpack.c.l.b16 %v145
    %v301 = vunpack.c.h.b16 %v145
    %v302 = vunpack.c.l.b16 %v146
    %v303 = vunpack.c.h.b16 %v146
    %v304 = vunpack.c.l.b16 %v147
    %v305 = vunpack.c.h.b16 %v147
    %v306 = vunpack.c.l.b16 %v148
    %v307 = vunpack.c.h.b16 %v148
    %v308 = vunpack.c.l.b16 %v149
    %v309 = vunpack.c.h.b16 %v149
    %v310 = vunpack.c.l.b16 %v150
    %v311 = vunpack.c.h.b16 %v150
    %v312 = vpack.c.b16 %v218, %v216
    %v313 = vpack.c.b16 %v219, %v217
    %v314 = vpack.c.b16 %v222, %v220
    %v315 = vpack.c.b16 %v223, %v221
    %v316 = vpack.c.b16 %v226, %v224
    %v317 = vpack.c.b16 %v227, %v225
    %v318 = vpack.c.b16 %v230, %v228
    %v319 = vpack.c.b16 %v231, %v229
    %v320 = vpack.c.b16 %v234, %v232
    %v321 = vpack.c.b16 %v235, %v233
    %v322 = vpack.c.b16 %v238, %v236
    %v323 = vpack.c.b16 %v239, %v237
    %v324 = vpack.c.b16 %v242, %v240
    %v325 = vpack.c.b16 %v243, %v241
    %v326 = vpack.c.b16 %v246, %v244
    %v327 = vpack.c.b16 %v247, %v245
    %v328 = vpack.c.b16 %v250, %v248
    %v329 = vpack.c.b16 %v251, %v249
    %v330 = vpack.c.b16 %v254, %v252
    %v331 = vpack.c.b16 %v255, %v253
    %v332 = vpack.c.b16 %v258, %v256
    %v333 = vpack.c.b16 %v259, %v257
    %v334 = vpack.c.b16 %v262, %v260
    %v335 = vpack.c.b16 %v263, %v261
    %v336 = vpack.c.b16 %v266, %v264
    %v337 = vpack.c.b16 %v267, %v265
    %v338 = vpack.c.b16 %v270, %v268
    %v339 = vpack.c.b16 %v271, %v269
    %v340 = vpack.c.b16 %v274, %v272
    %v341 = vpack.c.b16 %v275, %v273
    %v342 = vpack.c.b16 %v278, %v276
    %v343 = vpack.c.b16 %v279, %v277
    %v344 = vpack.c.b16 %v282, %v280
    %v345 = vpack.c.b16 %v283, %v281
    %v346 = vpack.c.b16 %v286, %v284
    %v347 = vpack.c.b16 %v287, %v285
    %v348 = vpack.c.b16 %v290, %v288
    %v349 = vpack.c.b16 %v291, %v289
    %v350 = vpack.c.b16 %v294, %v292
    %v351 = vpack.c.b16 %v295, %v293
    %v352 = vpack.c.b16 %v298, %v296
    %v353 = vpack.c.b16 %v299, %v297
    %v354 = vpack.c.b16 %v302, %v300
    %v355 = vpack.c.b16 %v303, %v301
    %v356 = vpack.c.b16 %v306, %v304
    %v357 = vpack.c.b16 %v307, %v305
    %v358 = vpack.c.b16 %v310, %v308
    %v359 = vpack.c.b16 %v311, %v309
    %408 = vmatpush.bf16.msra.mxu0 %v326
    %409 = vmatpush.bf16.msra.mxu0 %v324
    %410 = vmatpush.bf16.msra.mxu0 %v322
    %411 = vmatpush.bf16.msra.mxu0 %v320
    %412 = vmatpush.bf16.msra.mxu0 %v318
    %413 = vmatpush.bf16.msra.mxu0 %v316
    %414 = vmatpush.bf16.msra.mxu0 %v314
    %415 = vmatpush.bf16.msra.mxu0 %v312
    %416 = vmatmul.bf16.gmra.mxu0 %v162
    %v417 = vpop.f32.mrf.mxu0
    %v418 = vadd.f32 %v153, %v417
    %v419 = vpop.f32.mrf.mxu0
    %420 = vdwg.mxu0
    %421 = vmatpush.bf16.msra.mxu0 %v342
    %422 = vmatpush.bf16.msra.mxu0 %v340
    %423 = vmatpush.bf16.msra.mxu0 %v338
    %424 = vmatpush.bf16.msra.mxu0 %v336
    %425 = vmatpush.bf16.msra.mxu0 %v334
    %426 = vmatpush.bf16.msra.mxu0 %v332
    %427 = vmatpush.bf16.msra.mxu0 %v330
    %428 = vmatpush.bf16.msra.mxu0 %v328
    %429 = vmatmul.bf16.gmra.mxu0 %v163
    %v430 = vpop.f32.mrf.mxu0
    %v431 = vadd.f32 %v418, %v430
    %v432 = vpop.f32.mrf.mxu0
    %433 = vdwg.mxu0
    %434 = vmatpush.bf16.msra.mxu0 %v358
    %435 = vmatpush.bf16.msra.mxu0 %v356
    %436 = vmatpush.bf16.msra.mxu0 %v354
    %437 = vmatpush.bf16.msra.mxu0 %v352
    %438 = vmatpush.bf16.msra.mxu0 %v350
    %439 = vmatpush.bf16.msra.mxu0 %v348
    %440 = vmatpush.bf16.msra.mxu0 %v346
    %441 = vmatpush.bf16.msra.mxu0 %v344
    %442 = vmatmul.bf16.gmra.mxu0 %v164
    %v443 = vpop.f32.mrf.mxu0
    %v444 = vadd.f32 %v431, %v443
    %v445 = vpop.f32.mrf.mxu0
    %446 = vdwg.mxu0
    %447 = vmatpush.bf16.msra.mxu0 %v327
    %448 = vmatpush.bf16.msra.mxu0 %v325
    %449 = vmatpush.bf16.msra.mxu0 %v323
    %450 = vmatpush.bf16.msra.mxu0 %v321
    %451 = vmatpush.bf16.msra.mxu0 %v319
    %452 = vmatpush.bf16.msra.mxu0 %v317
    %453 = vmatpush.bf16.msra.mxu0 %v315
    %454 = vmatpush.bf16.msra.mxu0 %v313
    %455 = vmatmul.bf16.gmra.mxu0 %v162
    %v456 = vpop.f32.mrf.mxu0
    %v457 = vadd.f32 %v154, %v456
    %v458 = vpop.f32.mrf.mxu0
    %459 = vdwg.mxu0
    %460 = vmatpush.bf16.msra.mxu0 %v343
    %461 = vmatpush.bf16.msra.mxu0 %v341
    %462 = vmatpush.bf16.msra.mxu0 %v339
    %463 = vmatpush.bf16.msra.mxu0 %v337
    %464 = vmatpush.bf16.msra.mxu0 %v335
    %465 = vmatpush.bf16.msra.mxu0 %v333
    %466 = vmatpush.bf16.msra.mxu0 %v331
    %467 = vmatpush.bf16.msra.mxu0 %v329
    %468 = vmatmul.bf16.gmra.mxu0 %v163
    %v469 = vpop.f32.mrf.mxu0
    %v470 = vadd.f32 %v457, %v469
    %v471 = vpop.f32.mrf.mxu0
    %472 = vdwg.mxu0
    %473 = vmatpush.bf16.msra.mxu0 %v359
    %474 = vmatpush.bf16.msra.mxu0 %v357
    %475 = vmatpush.bf16.msra.mxu0 %v355
    %476 = vmatpush.bf16.msra.mxu0 %v353
    %477 = vmatpush.bf16.msra.mxu0 %v351
    %478 = vmatpush.bf16.msra.mxu0 %v349
    %479 = vmatpush.bf16.msra.mxu0 %v347
    %480 = vmatpush.bf16.msra.mxu0 %v345
    %481 = vmatmul.bf16.gmra.mxu0 %v164
    %v482 = vpop.f32.mrf.mxu0
    %v483 = vadd.f32 %v470, %v482
    %v484 = vpop.f32.mrf.mxu0
    %485 = vdwg.mxu0
    %vm486 = vcmp.gt.f32.partialorder %v444, 0.0
    %vm487 = vcmp.gt.f32.partialorder %v483, 0.0
    %v488 = vmul.f32 %v444, 0.2
    %v489 = vmul.f32 %v483, 0.2
    %v490 = vsel %vm486, %v444, %v488
    %v491 = vsel %vm487, %v483, %v489
    %v492 = vpack.c.bf16 %v490, %v490
    %v493 = vpack.c.bf16 %v491, %v491
    %v494 = vld [vmem:[#allocation8] sm:$0xff]
    %v495 = vld [vmem:[#allocation8 + $0x8] sm:$0xff]
    %v496 = vld [vmem:[#allocation8 + $0x10] sm:$0xff]
    %v497 = vld [vmem:[#allocation8 + $0x18] sm:$0xff]
    %v498 = vld [vmem:[#allocation8 + $0x20] sm:$0xff]
    %v499 = vld [vmem:[#allocation8 + $0x28] sm:$0xff]
    %v500 = vld [vmem:[#allocation8 + $0x30] sm:$0xff]
    %v501 = vld [vmem:[#allocation8 + $0x38] sm:$0xff]
    %v502 = vld [vmem:[#allocation8 + $0x40] sm:$0xff]
    %v503 = vld [vmem:[#allocation8 + $0x48] sm:$0xff]
    %v504 = vld [vmem:[#allocation8 + $0x50] sm:$0xff]
    %v505 = vld [vmem:[#allocation8 + $0x58] sm:$0xff]
    %v506 = vld [vmem:[#allocation8 + $0x60] sm:$0xff]
    %v507 = vld [vmem:[#allocation8 + $0x68] sm:$0xff]
    %v508 = vld [vmem:[#allocation8 + $0x70] sm:$0xff]
    %v509 = vld [vmem:[#allocation8 + $0x78] sm:$0xff]
    %v510 = vld [vmem:[#allocation8 + $0x80] sm:$0xff]
    %v511 = vld [vmem:[#allocation8 + $0x88] sm:$0xff]
    %v512 = vld [vmem:[#allocation8 + $0x90] sm:$0xff]
    %v513 = vld [vmem:[#allocation8 + $0x98] sm:$0xff]
    %v514 = vld [vmem:[#allocation8 + $0xa0] sm:$0xff]
    %v515 = vld [vmem:[#allocation8 + $0xa8] sm:$0xff]
    %v516 = vld [vmem:[#allocation8 + $0xb0] sm:$0xff]
    %v517 = vld [vmem:[#allocation8 + $0xb8] sm:$0xff]
    %v518 = vld [vmem:[#allocation8 + $0xc0] sm:$0xff]
    %v519 = vld [vmem:[#allocation8 + $0xc8] sm:$0xff]
    %v520 = vld [vmem:[#allocation8 + $0xd0] sm:$0xff]
    %v521 = vld [vmem:[#allocation8 + $0xd8] sm:$0xff]
    %v522 = vld [vmem:[#allocation8 + $0xe0] sm:$0xff]
    %v523 = vld [vmem:[#allocation8 + $0xe8] sm:$0xff]
    %v524 = vld [vmem:[#allocation8 + $0xf0] sm:$0xff]
    %v525 = vld [vmem:[#allocation8 + $0xf8] sm:$0xff]
    %v526 = vld [vmem:[%s4] sm:$0x3]
    %v528 = vperm.slane %v526, 0
    %v529 = vperm.slane %v526, 1
    %v564 = vunpack.c.l.b16 %v494
    %v565 = vunpack.c.h.b16 %v494
    %v566 = vunpack.c.l.b16 %v495
    %v567 = vunpack.c.h.b16 %v495
    %v568 = vunpack.c.l.b16 %v496
    %v569 = vunpack.c.h.b16 %v496
    %v570 = vunpack.c.l.b16 %v497
    %v571 = vunpack.c.h.b16 %v497
    %v572 = vunpack.c.l.b16 %v498
    %v573 = vunpack.c.h.b16 %v498
    %v574 = vunpack.c.l.b16 %v499
    %v575 = vunpack.c.h.b16 %v499
    %v576 = vunpack.c.l.b16 %v500
    %v577 = vunpack.c.h.b16 %v500
    %v578 = vunpack.c.l.b16 %v501
    %v579 = vunpack.c.h.b16 %v501
    %v580 = vunpack.c.l.b16 %v502
    %v581 = vunpack.c.h.b16 %v502
    %v582 = vunpack.c.l.b16 %v503
    %v583 = vunpack.c.h.b16 %v503
    %v584 = vunpack.c.l.b16 %v504
    %v585 = vunpack.c.h.b16 %v504
    %v586 = vunpack.c.l.b16 %v505
    %v587 = vunpack.c.h.b16 %v505
    %v588 = vunpack.c.l.b16 %v506
    %v589 = vunpack.c.h.b16 %v506
    %v590 = vunpack.c.l.b16 %v507
    %v591 = vunpack.c.h.b16 %v507
    %v592 = vunpack.c.l.b16 %v508
    %v593 = vunpack.c.h.b16 %v508
    %v594 = vunpack.c.l.b16 %v509
    %v595 = vunpack.c.h.b16 %v509
    %v596 = vunpack.c.l.b16 %v510
    %v597 = vunpack.c.h.b16 %v510
    %v598 = vunpack.c.l.b16 %v511
    %v599 = vunpack.c.h.b16 %v511
    %v600 = vunpack.c.l.b16 %v512
    %v601 = vunpack.c.h.b16 %v512
    %v602 = vunpack.c.l.b16 %v513
    %v603 = vunpack.c.h.b16 %v513
    %v604 = vunpack.c.l.b16 %v514
    %v605 = vunpack.c.h.b16 %v514
    %v606 = vunpack.c.l.b16 %v515
    %v607 = vunpack.c.h.b16 %v515
    %v608 = vunpack.c.l.b16 %v516
    %v609 = vunpack.c.h.b16 %v516
    %v610 = vunpack.c.l.b16 %v517
    %v611 = vunpack.c.h.b16 %v517
    %v612 = vunpack.c.l.b16 %v518
    %v613 = vunpack.c.h.b16 %v518
    %v614 = vunpack.c.l.b16 %v519
    %v615 = vunpack.c.h.b16 %v519
    %v616 = vunpack.c.l.b16 %v520
    %v617 = vunpack.c.h.b16 %v520
    %v618 = vunpack.c.l.b16 %v521
    %v619 = vunpack.c.h.b16 %v521
    %v620 = vunpack.c.l.b16 %v522
    %v621 = vunpack.c.h.b16 %v522
    %v622 = vunpack.c.l.b16 %v523
    %v623 = vunpack.c.h.b16 %v523
    %v624 = vunpack.c.l.b16 %v524
    %v625 = vunpack.c.h.b16 %v524
    %v626 = vunpack.c.l.b16 %v525
    %v627 = vunpack.c.h.b16 %v525
    %v628 = vpack.c.b16 %v566, %v564
    %v629 = vpack.c.b16 %v567, %v565
    %v630 = vpack.c.b16 %v570, %v568
    %v631 = vpack.c.b16 %v571, %v569
    %v632 = vpack.c.b16 %v574, %v572
    %v633 = vpack.c.b16 %v575, %v573
    %v634 = vpack.c.b16 %v578, %v576
    %v635 = vpack.c.b16 %v579, %v577
    %v636 = vpack.c.b16 %v582, %v580
    %v637 = vpack.c.b16 %v583, %v581
    %v638 = vpack.c.b16 %v586, %v584
    %v639 = vpack.c.b16 %v587, %v585
    %v640 = vpack.c.b16 %v590, %v588
    %v641 = vpack.c.b16 %v591, %v589
    %v642 = vpack.c.b16 %v594, %v592
    %v643 = vpack.c.b16 %v595, %v593
    %v644 = vpack.c.b16 %v598, %v596
    %v645 = vpack.c.b16 %v599, %v597
    %v646 = vpack.c.b16 %v602, %v600
    %v647 = vpack.c.b16 %v603, %v601
    %v648 = vpack.c.b16 %v606, %v604
    %v649 = vpack.c.b16 %v607, %v605
    %v650 = vpack.c.b16 %v610, %v608
    %v651 = vpack.c.b16 %v611, %v609
    %v652 = vpack.c.b16 %v614, %v612
    %v653 = vpack.c.b16 %v615, %v613
    %v654 = vpack.c.b16 %v618, %v616
    %v655 = vpack.c.b16 %v619, %v617
    %v656 = vpack.c.b16 %v622, %v620
    %v657 = vpack.c.b16 %v623, %v621
    %v658 = vpack.c.b16 %v626, %v624
    %v659 = vpack.c.b16 %v627, %v625
    %692 = vmatpush.bf16.msra.mxu0 %v642
    %693 = vmatpush.bf16.msra.mxu0 %v640
    %694 = vmatpush.bf16.msra.mxu0 %v638
    %695 = vmatpush.bf16.msra.mxu0 %v636
    %696 = vmatpush.bf16.msra.mxu0 %v634
    %697 = vmatpush.bf16.msra.mxu0 %v632
    %698 = vmatpush.bf16.msra.mxu0 %v630
    %699 = vmatpush.bf16.msra.mxu0 %v628
    %700 = vmatmul.bf16.gmra.mxu0 %v492
    %v701 = vpop.f32.mrf.mxu0
    %v702 = vadd.f32 %v528, %v701
    %v703 = vpop.f32.mrf.mxu0
    %704 = vdwg.mxu0
    %705 = vmatpush.bf16.msra.mxu0 %v658
    %706 = vmatpush.bf16.msra.mxu0 %v656
    %707 = vmatpush.bf16.msra.mxu0 %v654
    %708 = vmatpush.bf16.msra.mxu0 %v652
    %709 = vmatpush.bf16.msra.mxu0 %v650
    %710 = vmatpush.bf16.msra.mxu0 %v648
    %711 = vmatpush.bf16.msra.mxu0 %v646
    %712 = vmatpush.bf16.msra.mxu0 %v644
    %713 = vmatmul.bf16.gmra.mxu0 %v493
    %v714 = vpop.f32.mrf.mxu0
    %v715 = vadd.f32 %v702, %v714
    %v716 = vpop.f32.mrf.mxu0
    %717 = vdwg.mxu0
    %718 = vmatpush.bf16.msra.mxu0 %v643
    %719 = vmatpush.bf16.msra.mxu0 %v641
    %720 = vmatpush.bf16.msra.mxu0 %v639
    %721 = vmatpush.bf16.msra.mxu0 %v637
    %722 = vmatpush.bf16.msra.mxu0 %v635
    %723 = vmatpush.bf16.msra.mxu0 %v633
    %724 = vmatpush.bf16.msra.mxu0 %v631
    %725 = vmatpush.bf16.msra.mxu0 %v629
    %726 = vmatmul.bf16.gmra.mxu0 %v492
    %v727 = vpop.f32.mrf.mxu0
    %v728 = vadd.f32 %v529, %v727
    %v729 = vpop.f32.mrf.mxu0
    %730 = vdwg.mxu0
    %731 = vmatpush.bf16.msra.mxu0 %v659
    %732 = vmatpush.bf16.msra.mxu0 %v657
    %733 = vmatpush.bf16.msra.mxu0 %v655
    %734 = vmatpush.bf16.msra.mxu0 %v653
    %735 = vmatpush.bf16.msra.mxu0 %v651
    %736 = vmatpush.bf16.msra.mxu0 %v649
    %737 = vmatpush.bf16.msra.mxu0 %v647
    %738 = vmatpush.bf16.msra.mxu0 %v645
    %739 = vmatmul.bf16.gmra.mxu0 %v493
    %v740 = vpop.f32.mrf.mxu0
    %v741 = vadd.f32 %v728, %v740
    %v742 = vpop.f32.mrf.mxu0
    %743 = vdwg.mxu0
    %vm744 = vcmp.gt.f32.partialorder %v715, 0.0
    %vm745 = vcmp.gt.f32.partialorder %v741, 0.0
    %v746 = vmul.f32 %v715, 0.2
    %v747 = vmul.f32 %v741, 0.2
    %v748 = vsel %vm744, %v715, %v746
    %v749 = vsel %vm745, %v741, %v747
    %v750 = vpack.c.bf16 %v748, %v748
    %v751 = vpack.c.bf16 %v749, %v749
    %v752 = vld [vmem:[#allocation10] sm:$0xf]
    %v753 = vld [vmem:[#allocation10 + $0x4] sm:$0xf]
    %v754 = vld [vmem:[#allocation10 + $0x8] sm:$0xf]
    %v755 = vld [vmem:[#allocation10 + $0xc] sm:$0xf]
    %v756 = vld [vmem:[#allocation10 + $0x10] sm:$0xf]
    %v757 = vld [vmem:[#allocation10 + $0x14] sm:$0xf]
    %v758 = vld [vmem:[#allocation10 + $0x18] sm:$0xf]
    %v759 = vld [vmem:[#allocation10 + $0x1c] sm:$0xf]
    %v760 = vld [vmem:[#allocation10 + $0x20] sm:$0xf]
    %v761 = vld [vmem:[#allocation10 + $0x24] sm:$0xf]
    %v762 = vld [vmem:[#allocation10 + $0x28] sm:$0xf]
    %v763 = vld [vmem:[#allocation10 + $0x2c] sm:$0xf]
    %v764 = vld [vmem:[#allocation10 + $0x30] sm:$0xf]
    %v765 = vld [vmem:[#allocation10 + $0x34] sm:$0xf]
    %v766 = vld [vmem:[#allocation10 + $0x38] sm:$0xf]
    %v767 = vld [vmem:[#allocation10 + $0x3c] sm:$0xf]
    %v768 = vld [vmem:[#allocation10 + $0x40] sm:$0xf]
    %v769 = vld [vmem:[#allocation10 + $0x44] sm:$0xf]
    %v770 = vld [vmem:[#allocation10 + $0x48] sm:$0xf]
    %v771 = vld [vmem:[#allocation10 + $0x4c] sm:$0xf]
    %v772 = vld [vmem:[#allocation10 + $0x50] sm:$0xf]
    %v773 = vld [vmem:[#allocation10 + $0x54] sm:$0xf]
    %v774 = vld [vmem:[#allocation10 + $0x58] sm:$0xf]
    %v775 = vld [vmem:[#allocation10 + $0x5c] sm:$0xf]
    %v776 = vld [vmem:[#allocation10 + $0x60] sm:$0xf]
    %v777 = vld [vmem:[#allocation10 + $0x64] sm:$0xf]
    %v778 = vld [vmem:[#allocation10 + $0x68] sm:$0xf]
    %v779 = vld [vmem:[#allocation10 + $0x6c] sm:$0xf]
    %v780 = vld [vmem:[#allocation10 + $0x70] sm:$0xf]
    %v781 = vld [vmem:[#allocation10 + $0x74] sm:$0xf]
    %v782 = vld [vmem:[#allocation10 + $0x78] sm:$0xf]
    %v783 = vld [vmem:[#allocation10 + $0x7c] sm:$0xf]
    %v784 = vld [vmem:[%s6] sm:$0x1]
    %v786 = vperm.slane %v784, 0
    %v820 = vunpack.c.l.b16 %v752
    %v821 = vunpack.c.l.b16 %v753
    %v822 = vunpack.c.l.b16 %v754
    %v823 = vunpack.c.l.b16 %v755
    %v824 = vunpack.c.l.b16 %v756
    %v825 = vunpack.c.l.b16 %v757
    %v826 = vunpack.c.l.b16 %v758
    %v827 = vunpack.c.l.b16 %v759
    %v828 = vunpack.c.l.b16 %v760
    %v829 = vunpack.c.l.b16 %v761
    %v830 = vunpack.c.l.b16 %v762
    %v831 = vunpack.c.l.b16 %v763
    %v832 = vunpack.c.l.b16 %v764
    %v833 = vunpack.c.l.b16 %v765
    %v834 = vunpack.c.l.b16 %v766
    %v835 = vunpack.c.l.b16 %v767
    %v836 = vunpack.c.l.b16 %v768
    %v837 = vunpack.c.l.b16 %v769
    %v838 = vunpack.c.l.b16 %v770
    %v839 = vunpack.c.l.b16 %v771
    %v840 = vunpack.c.l.b16 %v772
    %v841 = vunpack.c.l.b16 %v773
    %v842 = vunpack.c.l.b16 %v774
    %v843 = vunpack.c.l.b16 %v775
    %v844 = vunpack.c.l.b16 %v776
    %v845 = vunpack.c.l.b16 %v777
    %v846 = vunpack.c.l.b16 %v778
    %v847 = vunpack.c.l.b16 %v779
    %v848 = vunpack.c.l.b16 %v780
    %v849 = vunpack.c.l.b16 %v781
    %v850 = vunpack.c.l.b16 %v782
    %v851 = vunpack.c.l.b16 %v783
    %v852 = vpack.c.b16 %v821, %v820
    %v853 = vpack.c.b16 %v823, %v822
    %v854 = vpack.c.b16 %v825, %v824
    %v855 = vpack.c.b16 %v827, %v826
    %v856 = vpack.c.b16 %v829, %v828
    %v857 = vpack.c.b16 %v831, %v830
    %v858 = vpack.c.b16 %v833, %v832
    %v859 = vpack.c.b16 %v835, %v834
    %v860 = vpack.c.b16 %v837, %v836
    %v861 = vpack.c.b16 %v839, %v838
    %v862 = vpack.c.b16 %v841, %v840
    %v863 = vpack.c.b16 %v843, %v842
    %v864 = vpack.c.b16 %v845, %v844
    %v865 = vpack.c.b16 %v847, %v846
    %v866 = vpack.c.b16 %v849, %v848
    %v867 = vpack.c.b16 %v851, %v850
    %884 = vmatpush.bf16.msra.mxu0 %v859
    %885 = vmatpush.bf16.msra.mxu0 %v858
    %886 = vmatpush.bf16.msra.mxu0 %v857
    %887 = vmatpush.bf16.msra.mxu0 %v856
    %888 = vmatpush.bf16.msra.mxu0 %v855
    %889 = vmatpush.bf16.msra.mxu0 %v854
    %890 = vmatpush.bf16.msra.mxu0 %v853
    %891 = vmatpush.bf16.msra.mxu0 %v852
    %892 = vmatmul.bf16.gmra.mxu0 %v750
    %v893 = vpop.f32.mrf.mxu0
    %v894 = vadd.f32 %v786, %v893
    %v895 = vpop.f32.mrf.mxu0
    %896 = vdwg.mxu0
    %897 = vmatpush.bf16.msra.mxu0 %v867
    %898 = vmatpush.bf16.msra.mxu0 %v866
    %899 = vmatpush.bf16.msra.mxu0 %v865
    %900 = vmatpush.bf16.msra.mxu0 %v864
    %901 = vmatpush.bf16.msra.mxu0 %v863
    %902 = vmatpush.bf16.msra.mxu0 %v862
    %903 = vmatpush.bf16.msra.mxu0 %v861
    %904 = vmatpush.bf16.msra.mxu0 %v860
    %905 = vmatmul.bf16.gmra.mxu0 %v751
    %v906 = vpop.f32.mrf.mxu0
    %v907 = vadd.f32 %v894, %v906
    %v908 = vpop.f32.mrf.mxu0
    %909 = vdwg.mxu0
    %v910 = vtanh.pop %v907
    %v911 = vpack.c.bf16 %v910, %v910
    %912 = vst [vmem:[#allocation11] sm:$0xf] %v911
    // Predicated region
    $region50: #{tpu_custom_call.1} parent=1 // pred_check
      _
    $region51: #{tpu_custom_call.1} parent=1 // pred_check_branch
      %914 = sbr.rel (0) target = $region53
    $region52: #{tpu_custom_call.1} parent=1 // pred_region
      %916 = vsyncadd [#allocation4], 0
      %s918 = sshll.u32 [#allocation11], 4
      %s919 = int_to_ptr.vmem [resolvable:$true] %s918
      %s920 = sshll.u32 %s7, 4
      %s921 = int_to_ptr.hbm [resolvable:$true] %s920
      %923 = dma.vmem_to_hbm [thread:$0]  %s919, 64, %s921, [#allocation4]
    $region53: #{tpu_custom_call.1} parent=1 // pred_fallthru
      _
    // Predicated region
    $region54: #{tpu_custom_call.1} parent=1 // pred_check
      _
    $region55: #{tpu_custom_call.1} parent=1 // pred_check_branch
      %925 = sbr.rel (0) target = $region57
    $region56: #{tpu_custom_call.1} parent=1 // pred_region
      %927 = dma.done [#allocation4], 64
    $region57: #{tpu_custom_call.1} parent=1 // pred_fallthru
      _
    %928 = vsyncpa [#allocation3], 1
    %929 = vsyncpa [#allocation6], 1
    %930 = vsyncpa [#allocation9], 1
    %931 = vsyncpa [#allocation4], 1

</llo_original>
